<compile_context>
chip_gen: v7x
topology: tpu7x:2x2x1
jax: 0.10.0
libtpu: 0.0.40
codegen_flags: <defaults>
</compile_context>

<pallas_src>
import jax
import jax.numpy as jnp
from jax import lax
from jax.experimental import pallas as pl
from jax.experimental.pallas import tpu as pltpu

N_CHANNELS = 9
TIME_RANGE = 13
HIDDEN = (128, 64, 32)
F_HALF = N_CHANNELS * TIME_RANGE          # 117 features per input stream
IN_FEATURES = F_HALF * 2                  # 234


def _round_up(x, m):
    return ((x + m - 1) // m) * m


def _disc_kernel(cond_ref, out_ref,
                 w1c_ref, w1o_ref, b1_ref,
                 w2_ref, b2_ref,
                 w3_ref, b3_ref,
                 w4_ref, b4_ref,
                 y_ref):
    # Layer 1 as a split-K matmul: concat(cond, out) @ W1 == cond@W1[:117] + out@W1[117:].
    # Operands are bf16, accumulation f32 (preferred_element_type).
    h = jnp.dot(cond_ref[...], w1c_ref[...], preferred_element_type=jnp.float32)
    h = h + jnp.dot(out_ref[...], w1o_ref[...], preferred_element_type=jnp.float32)
    h = jnp.maximum(h + b1_ref[...], 0.0).astype(w2_ref.dtype)   # bias/ReLU f32, back to bf16

    h = jnp.dot(h, w2_ref[...], preferred_element_type=jnp.float32) + b2_ref[...]
    h = jnp.maximum(h, 0.0).astype(w3_ref.dtype)

    h = jnp.dot(h, w3_ref[...], preferred_element_type=jnp.float32) + b3_ref[...]
    h = jnp.maximum(h, 0.0).astype(w4_ref.dtype)

    # Final (32 -> 1) layer: contract w4 (1, 32) against h (bt, 32) on the shared
    # feature axis (A @ B^T form) -> (1, batch_tile).  Batch lands on the lane
    # axis, so the output store is lane-dense instead of a masked width-1 column.
    z = lax.dot_general(w4_ref[...], h,
                        dimension_numbers=(((1,), (1,)), ((), ())),
                        preferred_element_type=jnp.float32)
    y_ref[...] = jax.nn.sigmoid(z + b4_ref[...])


def init_params(key):
    """Deterministic synthetic parameters (nn.Linear shapes, stored as (in, out))."""
    dims = [IN_FEATURES, HIDDEN[0], HIDDEN[1], HIDDEN[2], 1]
    params = []
    keys = jax.random.split(key, len(dims) - 1)
    for k, (din, dout) in zip(keys, zip(dims[:-1], dims[1:])):
        kw, kb = jax.random.split(k)
        bound = 1.0 / jnp.sqrt(din)
        w = jax.random.uniform(kw, (din, dout), jnp.float32, -bound, bound)
        b = jax.random.uniform(kb, (1, dout), jnp.float32, -bound, bound)
        params.append((w, b))
    return params


def discriminator_forward(condition, output, params, *, batch_tile=2048,
                          pad_features=False, compute_dtype=jnp.bfloat16):
    B, fc = condition.shape
    assert fc == F_HALF and output.shape == (B, F_HALF)

    (w1, b1), (w2, b2), (w3, b3), (w4, b4) = params
    # Split the first-layer weight so no concatenated input ever touches HBM.
    w1c, w1o = w1[:F_HALF], w1[F_HALF:]
    # Final-layer weight as a (1, 32) row so the kernel emits a (1, batch) output.
    w4r = w4.reshape(1, HIDDEN[2])
    b4r = b4.reshape(1, 1)

    # Optional 117 -> 128 feature padding (aligned DMA rows / exact K tiles).
    # Sweep on v6e/v7x; leave off on bandwidth-bound v5e.
    if pad_features and F_HALF % 128 != 0:
        f_in = _round_up(F_HALF, 128)
        cpad = ((0, 0), (0, f_in - F_HALF))
        condition = jnp.pad(condition, cpad)
        output = jnp.pad(output, cpad)
        wpad = ((0, f_in - F_HALF), (0, 0))
        w1c = jnp.pad(w1c, wpad)
        w1o = jnp.pad(w1o, wpad)
    else:
        f_in = F_HALF

    # bf16 streaming operands (f32 accumulation inside the kernel); biases stay f32.
    condition = condition.astype(compute_dtype)
    output = output.astype(compute_dtype)
    w1c, w1o, w2c, w3c, w4c = (a.astype(compute_dtype) for a in (w1c, w1o, w2, w3, w4r))
    b1, b2, b3, b4r = (a.astype(jnp.float32) for a in (b1, b2, b3, b4r))

    # Tile the batch: large tiles amortise the ~0.35us/step grid overhead; cap so
    # there are >= 2 grid steps when B > 128, keeping both v7x TensorCores busy.
    bt = int(batch_tile)
    if B > 128:
        bt = min(bt, _round_up(pl.cdiv(B, 2), 128))
    bt = max(128, (bt // 128) * 128)          # keep the lane-dense output 128-aligned
    n_tiles = pl.cdiv(B, bt)
    b_pad = n_tiles * bt
    if b_pad != B:
        bpad = ((0, b_pad - B), (0, 0))
        condition = jnp.pad(condition, bpad)
        output = jnp.pad(output, bpad)

    in_bytes = jnp.dtype(compute_dtype).itemsize

    # Grid-invariant operands: constant index_map, single-buffered (fetched once).
    def inv(arr):
        return pl.BlockSpec(arr.shape, lambda i: (0, 0), pipeline_mode=pl.Buffered(1))

    # Only raise the scoped-VMEM limit if a very large batch_tile sweep needs it.
    vmem_est = (2 * 2 * bt * f_in + 2 * bt) * in_bytes + (1 << 20)
    vmem_limit = None
    if vmem_est > 12 * 1024 * 1024:
        vmem_limit = min(2 * vmem_est, 56 * 1024 * 1024)   # stays under v7x's 64 MiB

    w_bytes = (in_bytes * int(w1c.size + w1o.size + w2c.size + w3c.size + w4c.size)
               + 4 * int(b1.size + b2.size + b3.size + b4r.size))
    cost = pl.CostEstimate(
        flops=2 * b_pad * (IN_FEATURES * HIDDEN[0] + HIDDEN[0] * HIDDEN[1]
                           + HIDDEN[1] * HIDDEN[2] + HIDDEN[2]),
        transcendentals=b_pad,                                   # sigmoid
        bytes_accessed=in_bytes * b_pad * 2 * f_in + 4 * b_pad + w_bytes,
    )

    y_row = pl.pallas_call(
        _disc_kernel,
        out_shape=jax.ShapeDtypeStruct((1, b_pad), jnp.float32),
        grid_spec=pltpu.PrefetchScalarGridSpec(
            num_scalar_prefetch=0,
            grid=(n_tiles,),
            in_specs=[
                pl.BlockSpec((bt, f_in), lambda i: (i, 0)),   # condition tile
                pl.BlockSpec((bt, f_in), lambda i: (i, 0)),   # output tile
                inv(w1c), inv(w1o), inv(b1),
                inv(w2c), inv(b2),
                inv(w3c), inv(b3),
                inv(w4c), inv(b4r),
            ],
            out_specs=pl.BlockSpec((1, bt), lambda i: (0, i)),  # lane-dense row
        ),
        compiler_params=pltpu.CompilerParams(
            # TODO(synk): sweep pltpu.CORE_PARALLEL here on v7x (string "parallel"
            # is the portable default and already megacore-shardable).
            dimension_semantics=("parallel",),
            vmem_limit_bytes=vmem_limit),
        cost_estimate=cost,
    )(condition, output, w1c, w1o, b1, w2c, b2, w3c, b3, w4c, b4r)

    # Back to the PyTorch-shaped (B, 1) result (drop batch padding).
    return y_row[0, :B].reshape(B, 1)


def _reference_forward(condition, output, params):
    """Pure-f32 reference (matches the PyTorch module numerics)."""
    x = jnp.concatenate([condition, output], axis=1).astype(jnp.float32)
    (w1, b1), (w2, b2), (w3, b3), (w4, b4) = params
    h = jnp.maximum(x @ w1 + b1, 0.0)
    h = jnp.maximum(h @ w2 + b2, 0.0)
    h = jnp.maximum(h @ w3 + b3, 0.0)
    return jax.nn.sigmoid(h @ w4 + b4)


def _reference_forward_bf16(condition, output, params):
    """Emulates the kernel arithmetic: bf16 operands, f32 accumulation/bias/ReLU."""
    c = lambda a: a.astype(jnp.bfloat16).astype(jnp.float32)
    (w1, b1), (w2, b2), (w3, b3), (w4, b4) = params
    x = jnp.concatenate([c(condition), c(output)], axis=1)
    h = c(jnp.maximum(x @ c(w1) + b1, 0.0))
    h = c(jnp.maximum(h @ c(w2) + b2, 0.0))
    h = c(jnp.maximum(h @ c(w3) + b3, 0.0))
    return jax.nn.sigmoid(h @ c(w4) + b4)


if __name__ == "__main__":
    key = jax.random.PRNGKey(0)
    k_params, k_cond, k_out = jax.random.split(key, 3)

    params = init_params(k_params)

    # Small demo batch, deliberately NOT a tile multiple.  With the >=2-grid-step
    # cap this runs as 2 tiles of 128 (exercises batch padding + a multi-step grid).
    B = 200
    condition = jax.random.normal(k_cond, (B, F_HALF), jnp.float32)
    output = jax.random.normal(k_out, (B, F_HALF), jnp.float32)

    y = discriminator_forward(condition, output, params)
    y = jax.block_until_ready(y)
    assert y.shape == (B, 1)

    # Tight check against a reference emulating bf16 operands / f32 accumulation.
    y_bf16_ref = _reference_forward_bf16(condition, output, params)
    assert jnp.allclose(y, y_bf16_ref, atol=1e-3, rtol=1e-3), \
        float(jnp.max(jnp.abs(y - y_bf16_ref)))

    # Loose sanity check against the pure-f32 (PyTorch-equivalent) reference.
    y_f32_ref = _reference_forward(condition, output, params)
    assert jnp.allclose(y, y_f32_ref, atol=2e-2, rtol=2e-2), \
        float(jnp.max(jnp.abs(y - y_f32_ref)))

    print("KERNEL_OK")
</pallas_src>

<mosaic_0001>
module attributes {stable_mosaic.version = 11 : i64} {
  func.func @_disc_kernel(%arg0: i32, %arg1: memref<128x117xbf16, #tpu.memory_space<vmem>>, %arg2: memref<128x117xbf16, #tpu.memory_space<vmem>>, %arg3: memref<117x128xbf16, #tpu.memory_space<vmem>>, %arg4: memref<117x128xbf16, #tpu.memory_space<vmem>>, %arg5: memref<1x128xf32, #tpu.memory_space<vmem>>, %arg6: memref<128x64xbf16, #tpu.memory_space<vmem>>, %arg7: memref<1x64xf32, #tpu.memory_space<vmem>>, %arg8: memref<64x32xbf16, #tpu.memory_space<vmem>>, %arg9: memref<1x32xf32, #tpu.memory_space<vmem>>, %arg10: memref<1x32xbf16, #tpu.memory_space<vmem>>, %arg11: memref<1x1xf32, #tpu.memory_space<vmem>>, %arg12: memref<1x128xf32, #tpu.memory_space<vmem>>) attributes {dimension_semantics = [#tpu.dimension_semantics<parallel>], iteration_bounds = array<i64: 2>, scalar_prefetch = 0 : i64, scratch_operands = 0 : i64, tpu.core_type = #tpu.core_type<tc>, window_params = [{transform_indices = @transform_0, window_bounds = array<i64: 128, 117>}, {transform_indices = @transform_1, window_bounds = array<i64: 128, 117>}, {pipeline_mode = #tpu.pipeline_mode<synchronous>, transform_indices = @transform_2, window_bounds = array<i64: 117, 128>}, {pipeline_mode = #tpu.pipeline_mode<synchronous>, transform_indices = @transform_3, window_bounds = array<i64: 117, 128>}, {pipeline_mode = #tpu.pipeline_mode<synchronous>, transform_indices = @transform_4, window_bounds = array<i64: 1, 128>}, {pipeline_mode = #tpu.pipeline_mode<synchronous>, transform_indices = @transform_5, window_bounds = array<i64: 128, 64>}, {pipeline_mode = #tpu.pipeline_mode<synchronous>, transform_indices = @transform_6, window_bounds = array<i64: 1, 64>}, {pipeline_mode = #tpu.pipeline_mode<synchronous>, transform_indices = @transform_7, window_bounds = array<i64: 64, 32>}, {pipeline_mode = #tpu.pipeline_mode<synchronous>, transform_indices = @transform_8, window_bounds = array<i64: 1, 32>}, {pipeline_mode = #tpu.pipeline_mode<synchronous>, transform_indices = @transform_9, window_bounds = array<i64: 1, 32>}, {pipeline_mode = #tpu.pipeline_mode<synchronous>, transform_indices = @transform_10, window_bounds = array<i64: 1, 1>}, {transform_indices = @transform_11, window_bounds = array<i64: 1, 128>}]} {
    %c0 = arith.constant 0 : index
    %c0_0 = arith.constant 0 : index
    %0 = vector.load %arg1[%c0, %c0_0] : memref<128x117xbf16, #tpu.memory_space<vmem>>, vector<128x117xbf16>
    %c0_1 = arith.constant 0 : index
    %c0_2 = arith.constant 0 : index
    %1 = vector.load %arg3[%c0_1, %c0_2] : memref<117x128xbf16, #tpu.memory_space<vmem>>, vector<117x128xbf16>
    %cst = arith.constant dense<0.000000e+00> : vector<128x128xf32>
    %2 = tpu.matmul %0, %1, %cst {dimension_numbers = #tpu.dot_dimension_numbers<[1], [0], [0], [1], [0, 0, 1, 1], [], []>} : vector<128x117xbf16>, vector<117x128xbf16>, vector<128x128xf32> -> vector<128x128xf32>
    %c0_3 = arith.constant 0 : index
    %c0_4 = arith.constant 0 : index
    %3 = vector.load %arg2[%c0_3, %c0_4] : memref<128x117xbf16, #tpu.memory_space<vmem>>, vector<128x117xbf16>
    %c0_5 = arith.constant 0 : index
    %c0_6 = arith.constant 0 : index
    %4 = vector.load %arg4[%c0_5, %c0_6] : memref<117x128xbf16, #tpu.memory_space<vmem>>, vector<117x128xbf16>
    %cst_7 = arith.constant dense<0.000000e+00> : vector<128x128xf32>
    %5 = tpu.matmul %3, %4, %cst_7 {dimension_numbers = #tpu.dot_dimension_numbers<[1], [0], [0], [1], [0, 0, 1, 1], [], []>} : vector<128x117xbf16>, vector<117x128xbf16>, vector<128x128xf32> -> vector<128x128xf32>
    %6 = arith.addf %2, %5 : vector<128x128xf32>
    %c0_8 = arith.constant 0 : index
    %c0_9 = arith.constant 0 : index
    %7 = vector.load %arg5[%c0_8, %c0_9] : memref<1x128xf32, #tpu.memory_space<vmem>>, vector<1x128xf32>
    %8 = vector.broadcast %7 : vector<1x128xf32> to vector<128x128xf32>
    %9 = arith.addf %6, %8 : vector<128x128xf32>
    %cst_10 = arith.constant 0.000000e+00 : f32
    %10 = vector.broadcast %cst_10 : f32 to vector<128x128xf32>
    %11 = arith.maximumf %9, %10 : vector<128x128xf32>
    %12 = arith.truncf %11 : vector<128x128xf32> to vector<128x128xbf16>
    %c0_11 = arith.constant 0 : index
    %c0_12 = arith.constant 0 : index
    %13 = vector.load %arg6[%c0_11, %c0_12] : memref<128x64xbf16, #tpu.memory_space<vmem>>, vector<128x64xbf16>
    %cst_13 = arith.constant dense<0.000000e+00> : vector<128x64xf32>
    %14 = tpu.matmul %12, %13, %cst_13 {dimension_numbers = #tpu.dot_dimension_numbers<[1], [0], [0], [1], [0, 0, 1, 1], [], []>} : vector<128x128xbf16>, vector<128x64xbf16>, vector<128x64xf32> -> vector<128x64xf32>
    %c0_14 = arith.constant 0 : index
    %c0_15 = arith.constant 0 : index
    %15 = vector.load %arg7[%c0_14, %c0_15] : memref<1x64xf32, #tpu.memory_space<vmem>>, vector<1x64xf32>
    %16 = vector.broadcast %15 : vector<1x64xf32> to vector<128x64xf32>
    %17 = arith.addf %14, %16 : vector<128x64xf32>
    %cst_16 = arith.constant 0.000000e+00 : f32
    %18 = vector.broadcast %cst_16 : f32 to vector<128x64xf32>
    %19 = arith.maximumf %17, %18 : vector<128x64xf32>
    %20 = arith.truncf %19 : vector<128x64xf32> to vector<128x64xbf16>
    %c0_17 = arith.constant 0 : index
    %c0_18 = arith.constant 0 : index
    %21 = vector.load %arg8[%c0_17, %c0_18] : memref<64x32xbf16, #tpu.memory_space<vmem>>, vector<64x32xbf16>
    %cst_19 = arith.constant dense<0.000000e+00> : vector<128x32xf32>
    %22 = tpu.matmul %20, %21, %cst_19 {dimension_numbers = #tpu.dot_dimension_numbers<[1], [0], [0], [1], [0, 0, 1, 1], [], []>} : vector<128x64xbf16>, vector<64x32xbf16>, vector<128x32xf32> -> vector<128x32xf32>
    %c0_20 = arith.constant 0 : index
    %c0_21 = arith.constant 0 : index
    %23 = vector.load %arg9[%c0_20, %c0_21] : memref<1x32xf32, #tpu.memory_space<vmem>>, vector<1x32xf32>
    %24 = vector.broadcast %23 : vector<1x32xf32> to vector<128x32xf32>
    %25 = arith.addf %22, %24 : vector<128x32xf32>
    %cst_22 = arith.constant 0.000000e+00 : f32
    %26 = vector.broadcast %cst_22 : f32 to vector<128x32xf32>
    %27 = arith.maximumf %25, %26 : vector<128x32xf32>
    %28 = arith.truncf %27 : vector<128x32xf32> to vector<128x32xbf16>
    %c0_23 = arith.constant 0 : index
    %c0_24 = arith.constant 0 : index
    %29 = vector.load %arg10[%c0_23, %c0_24] : memref<1x32xbf16, #tpu.memory_space<vmem>>, vector<1x32xbf16>
    %cst_25 = arith.constant dense<0.000000e+00> : vector<1x128xf32>
    %30 = tpu.matmul %29, %28, %cst_25 {dimension_numbers = #tpu.dot_dimension_numbers<[1], [1], [0], [0], [0, 0, 1, 0], [], []>} : vector<1x32xbf16>, vector<128x32xbf16>, vector<1x128xf32> -> vector<1x128xf32>
    %c0_26 = arith.constant 0 : index
    %c0_27 = arith.constant 0 : index
    %31 = vector.load %arg11[%c0_26, %c0_27] : memref<1x1xf32, #tpu.memory_space<vmem>>, vector<1x1xf32>
    %32 = vector.broadcast %31 : vector<1x1xf32> to vector<1x128xf32>
    %33 = arith.addf %30, %32 : vector<1x128xf32>
    %34 = arith.negf %33 : vector<1x128xf32>
    %35 = math.exp %34 : vector<1x128xf32>
    %cst_28 = arith.constant 1.000000e+00 : f32
    %36 = vector.broadcast %cst_28 : f32 to vector<1x128xf32>
    %37 = arith.addf %36, %35 : vector<1x128xf32>
    %38 = arith.divf %36, %37 : vector<1x128xf32>
    %c0_29 = arith.constant 0 : index
    %c0_30 = arith.constant 0 : index
    %39 = vector.load %arg12[%c0_29, %c0_30] : memref<1x128xf32, #tpu.memory_space<vmem>>, vector<1x128xf32>
    tpu.vector_store %arg12[%c0_29, %c0_30], %38 {strides = array<i32>} : memref<1x128xf32, #tpu.memory_space<vmem>>, vector<1x128xf32>,
    return
  }
  func.func @transform_0(%arg0: i32) -> (i32, i32) {
    %c0_i32 = arith.constant 0 : i32
    %c0_i32_0 = arith.constant 0 : i32
    return %arg0, %c0_i32 : i32, i32
  }
  func.func @transform_1(%arg0: i32) -> (i32, i32) {
    %c0_i32 = arith.constant 0 : i32
    %c0_i32_0 = arith.constant 0 : i32
    return %arg0, %c0_i32 : i32, i32
  }
  func.func @transform_2(%arg0: i32) -> (i32, i32) {
    %c0_i32 = arith.constant 0 : i32
    %c0_i32_0 = arith.constant 0 : i32
    %c0_i32_1 = arith.constant 0 : i32
    return %c0_i32, %c0_i32_0 : i32, i32
  }
  func.func @transform_3(%arg0: i32) -> (i32, i32) {
    %c0_i32 = arith.constant 0 : i32
    %c0_i32_0 = arith.constant 0 : i32
    %c0_i32_1 = arith.constant 0 : i32
    return %c0_i32, %c0_i32_0 : i32, i32
  }
  func.func @transform_4(%arg0: i32) -> (i32, i32) {
    %c0_i32 = arith.constant 0 : i32
    %c0_i32_0 = arith.constant 0 : i32
    %c0_i32_1 = arith.constant 0 : i32
    return %c0_i32, %c0_i32_0 : i32, i32
  }
  func.func @transform_5(%arg0: i32) -> (i32, i32) {
    %c0_i32 = arith.constant 0 : i32
    %c0_i32_0 = arith.constant 0 : i32
    %c0_i32_1 = arith.constant 0 : i32
    return %c0_i32, %c0_i32_0 : i32, i32
  }
  func.func @transform_6(%arg0: i32) -> (i32, i32) {
    %c0_i32 = arith.constant 0 : i32
    %c0_i32_0 = arith.constant 0 : i32
    %c0_i32_1 = arith.constant 0 : i32
    return %c0_i32, %c0_i32_0 : i32, i32
  }
  func.func @transform_7(%arg0: i32) -> (i32, i32) {
    %c0_i32 = arith.constant 0 : i32
    %c0_i32_0 = arith.constant 0 : i32
    %c0_i32_1 = arith.constant 0 : i32
    return %c0_i32, %c0_i32_0 : i32, i32
  }
  func.func @transform_8(%arg0: i32) -> (i32, i32) {
    %c0_i32 = arith.constant 0 : i32
    %c0_i32_0 = arith.constant 0 : i32
    %c0_i32_1 = arith.constant 0 : i32
    return %c0_i32, %c0_i32_0 : i32, i32
  }
  func.func @transform_9(%arg0: i32) -> (i32, i32) {
    %c0_i32 = arith.constant 0 : i32
    %c0_i32_0 = arith.constant 0 : i32
    %c0_i32_1 = arith.constant 0 : i32
    return %c0_i32, %c0_i32_0 : i32, i32
  }
  func.func @transform_10(%arg0: i32) -> (i32, i32) {
    %c0_i32 = arith.constant 0 : i32
    %c0_i32_0 = arith.constant 0 : i32
    %c0_i32_1 = arith.constant 0 : i32
    return %c0_i32, %c0_i32_0 : i32, i32
  }
  func.func @transform_11(%arg0: i32) -> (i32, i32) {
    %c0_i32 = arith.constant 0 : i32
    %c0_i32_0 = arith.constant 0 : i32
    return %c0_i32, %arg0 : i32, i32
  }
}

</mosaic_0001>

<llo_original>
// kernel: tpu_custom_call.1
$region0: #{tpu_custom_call.1}
  #allocation0 [shape = 'u32[]', space=smem, size = 0x4, offset = 0x4, fixed_abs, tag = 'smem constant byte address 0x4 - core index']
  #allocation1 [shape = 'u32[144,128]{1,0:T(1,128)}', space=vmem, size = 0x12000, scoped, tag = 'internal scratch']
  #allocation2 [shape = 'f32[1,1]{1,0:T(1,128)S(1)}', space=vmem, size = 0x200, scoped, tag = 'scoped memory for tpu_custom_call.1']
  %s0 = inlined_call_operand.vmem [shape: bf16[256,117], index: 0, kind: input, shape index: {}]
  %s1 = inlined_call_operand.vmem [shape: bf16[256,117], index: 1, kind: input, shape index: {}]
  %s2 = inlined_call_operand.vmem [shape: bf16[117,128], index: 2, kind: input, shape index: {}]
  %s3 = inlined_call_operand.vmem [shape: bf16[117,128], index: 3, kind: input, shape index: {}]
  %s4 = inlined_call_operand.vmem [shape: f32[1,128], index: 4, kind: input, shape index: {}]
  %s5 = inlined_call_operand.vmem [shape: bf16[128,64], index: 5, kind: input, shape index: {}]
  %s6 = inlined_call_operand.vmem [shape: f32[1,64], index: 6, kind: input, shape index: {}]
  %s7 = inlined_call_operand.vmem [shape: bf16[64,32], index: 7, kind: input, shape index: {}]
  %s8 = inlined_call_operand.vmem [shape: f32[1,32], index: 8, kind: input, shape index: {}]
  %s9 = inlined_call_operand.vmem [shape: bf16[1,32], index: 9, kind: input, shape index: {}]
  %s10 = inlined_call_operand.<no memory space> [shape: f32[1,1], index: 10, kind: input, shape index: {}]
  %s11 = inlined_call_operand.hbm [shape: f32[1,256], index: 11, kind: output, shape index: {}]
  %s12 = sld [smem:[#allocation0]]
  $region77: #{tpu_custom_call.1} parent=0
    _
  %s14 = ssub.s32 1, %s12
  %s15 = scalar_select 0, %s14, %s12
  %v16 = vstv %s10
  %17 = vst [vmem:[#allocation2] sm:$0x1] %v16
  $region1: #{tpu_custom_call.1} parent=0
    #allocation3 [shape = 'u8[1024]{0}', space=vmem, size = 0x400, scoped, tag = 'output window, operand 0']
    #allocation4 [shape = 's32[2]{0}', space=sflag, size = 0x8, scoped, tag = 'scoped memory for tpu_custom_call.1']
    %18 = vsyncpa [#allocation4], 0
    %s19 = scalar_lea.sflag [#allocation4], 1
    %20 = vsyncpa %s19, 0
    loop: start=0, step=1, limit=4
    $region2: #{tpu_custom_call.1} parent=1 // loop_pre_header
      _
    $region3: #{tpu_custom_call.1} parent=1 // loop_header
      %s22 = sphi 0, %s26
      %p23 = scmp.ge.s32.totalorder %s22, 4
      %s32 = sphi 0, %s34
      %s35 = sphi 0, %s32
      %s36 = sphi 0, %s35
      %s52 = sphi 0, %s36
      %s58 = sphi 0, %s60
      %s61 = sphi 0, %s58
      %s62 = sphi 0, %s61
      %s78 = sphi 0, %s62
      %s82 = sphi 0, %s82
      %s84 = sphi 0, %s82
      %s85 = sphi 0, %s84
      %s99 = sphi 0, %s85
      %s103 = sphi 0, %s103
      %s105 = sphi 0, %s103
      %s106 = sphi 0, %s105
      %s120 = sphi 0, %s106
      %s124 = sphi 0, %s124
      %s126 = sphi 0, %s124
      %s127 = sphi 0, %s126
      %s141 = sphi 0, %s127
      %s145 = sphi 0, %s145
      %s147 = sphi 0, %s145
      %s148 = sphi 0, %s147
      %s162 = sphi 0, %s148
      %s166 = sphi 0, %s166
      %s168 = sphi 0, %s166
      %s169 = sphi 0, %s168
      %s183 = sphi 0, %s169
      %s187 = sphi 0, %s187
      %s189 = sphi 0, %s187
      %s190 = sphi 0, %s189
      %s204 = sphi 0, %s190
      %s208 = sphi 0, %s208
      %s210 = sphi 0, %s208
      %s211 = sphi 0, %s210
      %s225 = sphi 0, %s211
      %s229 = sphi 0, %s229
      %s231 = sphi 0, %s229
      %s232 = sphi 0, %s231
      %s246 = sphi 0, %s232
      %s250 = sphi 0, %s250
      %s252 = sphi 0, %s250
      %s253 = sphi 0, %s252
      %s267 = sphi 0, %s253
      %s273 = sphi 0, %s275
      %s276 = sphi 0, %s273
      %s277 = sphi 0, %s276
      %s293 = sphi 0, %s277
    $region4: #{tpu_custom_call.1} parent=1 // loop_header_branch
      %25 = sbr.rel (%p23) target = $region8
    $region5: #{tpu_custom_call.1} parent=1 // loop_body
      %s27 = ssub.s32 %s22, 1
      %s28 = ssub.s32 %s22, 2
      %s29 = sadd.s32 %s22, 1
      %s30 = ssub.s32 %s22, %s29
      %p31 = scmp.eq.s32.totalorder %s30, 0
      %s33 = sadd.s32 %s32, 1
      %s34 = scalar_select %p31, %s32, %s33
      %p37 = pneg %p31
      %p38 = scmp.eq.s32.totalorder %s22, 1
      %p39 = por %p37, %p38
      %p40 = scmp.ne.s32.totalorder %s32, %s35
      %p41 = scmp.eq.s32.totalorder %s22, 0
      %p42 = por %p40, %p41
      %p43 = scmp.ne.s32.totalorder %s32, %s35
      %p44 = scmp.eq.s32.totalorder %s27, 1
      %p45 = por %p43, %p44
      %p46 = scmp.ne.s32.totalorder %s35, %s36
      %p47 = scmp.eq.s32.totalorder %s27, 0
      %p48 = por %p46, %p47
      %p49 = scmp.ne.s32.totalorder %s35, %s36
      %p50 = scmp.eq.s32.totalorder %s28, 1
      %p51 = por %p49, %p50
      %p53 = scmp.ne.s32.totalorder %s36, %s52
      %p54 = scmp.eq.s32.totalorder %s28, 0
      %p55 = por %p53, %p54
      %s56 = ssub.s32 %s22, %s29
      %p57 = scmp.eq.s32.totalorder %s56, 0
      %s59 = sadd.s32 %s58, 1
      %s60 = scalar_select %p57, %s58, %s59
      %p63 = pneg %p57
      %p64 = scmp.eq.s32.totalorder %s22, 1
      %p65 = por %p63, %p64
      %p66 = scmp.ne.s32.totalorder %s58, %s61
      %p67 = scmp.eq.s32.totalorder %s22, 0
      %p68 = por %p66, %p67
      %p69 = scmp.ne.s32.totalorder %s58, %s61
      %p70 = scmp.eq.s32.totalorder %s27, 1
      %p71 = por %p69, %p70
      %p72 = scmp.ne.s32.totalorder %s61, %s62
      %p73 = scmp.eq.s32.totalorder %s27, 0
      %p74 = por %p72, %p73
      %p75 = scmp.ne.s32.totalorder %s61, %s62
      %p76 = scmp.eq.s32.totalorder %s28, 1
      %p77 = por %p75, %p76
      %p79 = scmp.ne.s32.totalorder %s62, %s78
      %p80 = scmp.eq.s32.totalorder %s28, 0
      %p81 = por %p79, %p80
      %s83 = sadd.s32 %s82, 1
      %p86 = scmp.eq.s32.totalorder %s22, 1
      %p87 = scmp.ne.s32.totalorder %s82, %s84
      %p88 = scmp.eq.s32.totalorder %s22, 0
      %p89 = por %p87, %p88
      %p90 = scmp.ne.s32.totalorder %s82, %s84
      %p91 = scmp.eq.s32.totalorder %s27, 1
      %p92 = por %p90, %p91
      %p93 = scmp.ne.s32.totalorder %s84, %s85
      %p94 = scmp.eq.s32.totalorder %s27, 0
      %p95 = por %p93, %p94
      %p96 = scmp.ne.s32.totalorder %s84, %s85
      %p97 = scmp.eq.s32.totalorder %s28, 1
      %p98 = por %p96, %p97
      %p100 = scmp.ne.s32.totalorder %s85, %s99
      %p101 = scmp.eq.s32.totalorder %s28, 0
      %p102 = por %p100, %p101
      %s104 = sadd.s32 %s103, 1
      %p107 = scmp.eq.s32.totalorder %s22, 1
      %p108 = scmp.ne.s32.totalorder %s103, %s105
      %p109 = scmp.eq.s32.totalorder %s22, 0
      %p110 = por %p108, %p109
      %p111 = scmp.ne.s32.totalorder %s103, %s105
      %p112 = scmp.eq.s32.totalorder %s27, 1
      %p113 = por %p111, %p112
      %p114 = scmp.ne.s32.totalorder %s105, %s106
      %p115 = scmp.eq.s32.totalorder %s27, 0
      %p116 = por %p114, %p115
      %p117 = scmp.ne.s32.totalorder %s105, %s106
      %p118 = scmp.eq.s32.totalorder %s28, 1
      %p119 = por %p117, %p118
      %p121 = scmp.ne.s32.totalorder %s106, %s120
      %p122 = scmp.eq.s32.totalorder %s28, 0
      %p123 = por %p121, %p122
      %s125 = sadd.s32 %s124, 1
      %p128 = scmp.eq.s32.totalorder %s22, 1
      %p129 = scmp.ne.s32.totalorder %s124, %s126
      %p130 = scmp.eq.s32.totalorder %s22, 0
      %p131 = por %p129, %p130
      %p132 = scmp.ne.s32.totalorder %s124, %s126
      %p133 = scmp.eq.s32.totalorder %s27, 1
      %p134 = por %p132, %p133
      %p135 = scmp.ne.s32.totalorder %s126, %s127
      %p136 = scmp.eq.s32.totalorder %s27, 0
      %p137 = por %p135, %p136
      %p138 = scmp.ne.s32.totalorder %s126, %s127
      %p139 = scmp.eq.s32.totalorder %s28, 1
      %p140 = por %p138, %p139
      %p142 = scmp.ne.s32.totalorder %s127, %s141
      %p143 = scmp.eq.s32.totalorder %s28, 0
      %p144 = por %p142, %p143
      %s146 = sadd.s32 %s145, 1
      %p149 = scmp.eq.s32.totalorder %s22, 1
      %p150 = scmp.ne.s32.totalorder %s145, %s147
      %p151 = scmp.eq.s32.totalorder %s22, 0
      %p152 = por %p150, %p151
      %p153 = scmp.ne.s32.totalorder %s145, %s147
      %p154 = scmp.eq.s32.totalorder %s27, 1
      %p155 = por %p153, %p154
      %p156 = scmp.ne.s32.totalorder %s147, %s148
      %p157 = scmp.eq.s32.totalorder %s27, 0
      %p158 = por %p156, %p157
      %p159 = scmp.ne.s32.totalorder %s147, %s148
      %p160 = scmp.eq.s32.totalorder %s28, 1
      %p161 = por %p159, %p160
      %p163 = scmp.ne.s32.totalorder %s148, %s162
      %p164 = scmp.eq.s32.totalorder %s28, 0
      %p165 = por %p163, %p164
      %s167 = sadd.s32 %s166, 1
      %p170 = scmp.eq.s32.totalorder %s22, 1
      %p171 = scmp.ne.s32.totalorder %s166, %s168
      %p172 = scmp.eq.s32.totalorder %s22, 0
      %p173 = por %p171, %p172
      %p174 = scmp.ne.s32.totalorder %s166, %s168
      %p175 = scmp.eq.s32.totalorder %s27, 1
      %p176 = por %p174, %p175
      %p177 = scmp.ne.s32.totalorder %s168, %s169
      %p178 = scmp.eq.s32.totalorder %s27, 0
      %p179 = por %p177, %p178
      %p180 = scmp.ne.s32.totalorder %s168, %s169
      %p181 = scmp.eq.s32.totalorder %s28, 1
      %p182 = por %p180, %p181
      %p184 = scmp.ne.s32.totalorder %s169, %s183
      %p185 = scmp.eq.s32.totalorder %s28, 0
      %p186 = por %p184, %p185
      %s188 = sadd.s32 %s187, 1
      %p191 = scmp.eq.s32.totalorder %s22, 1
      %p192 = scmp.ne.s32.totalorder %s187, %s189
      %p193 = scmp.eq.s32.totalorder %s22, 0
      %p194 = por %p192, %p193
      %p195 = scmp.ne.s32.totalorder %s187, %s189
      %p196 = scmp.eq.s32.totalorder %s27, 1
      %p197 = por %p195, %p196
      %p198 = scmp.ne.s32.totalorder %s189, %s190
      %p199 = scmp.eq.s32.totalorder %s27, 0
      %p200 = por %p198, %p199
      %p201 = scmp.ne.s32.totalorder %s189, %s190
      %p202 = scmp.eq.s32.totalorder %s28, 1
      %p203 = por %p201, %p202
      %p205 = scmp.ne.s32.totalorder %s190, %s204
      %p206 = scmp.eq.s32.totalorder %s28, 0
      %p207 = por %p205, %p206
      %s209 = sadd.s32 %s208, 1
      %p212 = scmp.eq.s32.totalorder %s22, 1
      %p213 = scmp.ne.s32.totalorder %s208, %s210
      %p214 = scmp.eq.s32.totalorder %s22, 0
      %p215 = por %p213, %p214
      %p216 = scmp.ne.s32.totalorder %s208, %s210
      %p217 = scmp.eq.s32.totalorder %s27, 1
      %p218 = por %p216, %p217
      %p219 = scmp.ne.s32.totalorder %s210, %s211
      %p220 = scmp.eq.s32.totalorder %s27, 0
      %p221 = por %p219, %p220
      %p222 = scmp.ne.s32.totalorder %s210, %s211
      %p223 = scmp.eq.s32.totalorder %s28, 1
      %p224 = por %p222, %p223
      %p226 = scmp.ne.s32.totalorder %s211, %s225
      %p227 = scmp.eq.s32.totalorder %s28, 0
      %p228 = por %p226, %p227
      %s230 = sadd.s32 %s229, 1
      %p233 = scmp.eq.s32.totalorder %s22, 1
      %p234 = scmp.ne.s32.totalorder %s229, %s231
      %p235 = scmp.eq.s32.totalorder %s22, 0
      %p236 = por %p234, %p235
      %p237 = scmp.ne.s32.totalorder %s229, %s231
      %p238 = scmp.eq.s32.totalorder %s27, 1
      %p239 = por %p237, %p238
      %p240 = scmp.ne.s32.totalorder %s231, %s232
      %p241 = scmp.eq.s32.totalorder %s27, 0
      %p242 = por %p240, %p241
      %p243 = scmp.ne.s32.totalorder %s231, %s232
      %p244 = scmp.eq.s32.totalorder %s28, 1
      %p245 = por %p243, %p244
      %p247 = scmp.ne.s32.totalorder %s232, %s246
      %p248 = scmp.eq.s32.totalorder %s28, 0
      %p249 = por %p247, %p248
      %s251 = sadd.s32 %s250, 1
      %p254 = scmp.eq.s32.totalorder %s22, 1
      %p255 = scmp.ne.s32.totalorder %s250, %s252
      %p256 = scmp.eq.s32.totalorder %s22, 0
      %p257 = por %p255, %p256
      %p258 = scmp.ne.s32.totalorder %s250, %s252
      %p259 = scmp.eq.s32.totalorder %s27, 1
      %p260 = por %p258, %p259
      %p261 = scmp.ne.s32.totalorder %s252, %s253
      %p262 = scmp.eq.s32.totalorder %s27, 0
      %p263 = por %p261, %p262
      %p264 = scmp.ne.s32.totalorder %s252, %s253
      %p265 = scmp.eq.s32.totalorder %s28, 1
      %p266 = por %p264, %p265
      %p268 = scmp.ne.s32.totalorder %s253, %s267
      %p269 = scmp.eq.s32.totalorder %s28, 0
      %p270 = por %p268, %p269
      %s271 = ssub.s32 %s22, %s29
      %p272 = scmp.eq.s32.totalorder %s271, 0
      %s274 = sadd.s32 %s273, 1
      %s275 = scalar_select %p272, %s273, %s274
      %p278 = pneg %p272
      %p279 = scmp.eq.s32.totalorder %s22, 1
      %p280 = por %p278, %p279
      %p281 = scmp.ne.s32.totalorder %s273, %s276
      %p282 = scmp.eq.s32.totalorder %s22, 0
      %p283 = por %p281, %p282
      %p284 = scmp.ne.s32.totalorder %s273, %s276
      %p285 = scmp.eq.s32.totalorder %s27, 1
      %p286 = por %p284, %p285
      %p287 = scmp.ne.s32.totalorder %s276, %s277
      %p288 = scmp.eq.s32.totalorder %s27, 0
      %p289 = por %p287, %p288
      %p290 = scmp.ne.s32.totalorder %s276, %s277
      %p291 = scmp.eq.s32.totalorder %s28, 1
      %p292 = por %p290, %p291
      %p294 = scmp.ne.s32.totalorder %s277, %s293
      %p295 = scmp.eq.s32.totalorder %s28, 0
      %p296 = por %p294, %p295
      %p297 = scmp.le.s32.totalorder 1, %s22
      %p298 = scmp.lt.s32.totalorder %s22, 3
      %p299 = pnand %p297, %p298
      %p300 = pneg %p299
      // Predicated region
      $region9: #{tpu_custom_call.1} parent=5 // pred_check
        _
      $region10: #{tpu_custom_call.1} parent=5 // pred_check_branch
        %302 = sbr.rel (%p299) target = $region12
      $region11: #{tpu_custom_call.1} parent=5 // pred_region
        %s303 = ssub.s32 %s22, 1
        // Predicated region
        $region13: #{tpu_custom_call.1} parent=11 // pred_check
          %p304 = pneg %p95
        $region14: #{tpu_custom_call.1} parent=11 // pred_check_branch
          %306 = sbr.rel (%p304) target = $region16
        $region15: #{tpu_custom_call.1} parent=11 // pred_region
          _
        $region16: #{tpu_custom_call.1} parent=11 // pred_fallthru
          _
        // Predicated region
        $region17: #{tpu_custom_call.1} parent=11 // pred_check
          %p307 = pneg %p116
        $region18: #{tpu_custom_call.1} parent=11 // pred_check_branch
          %309 = sbr.rel (%p307) target = $region20
        $region19: #{tpu_custom_call.1} parent=11 // pred_region
          _
        $region20: #{tpu_custom_call.1} parent=11 // pred_fallthru
          _
        // Predicated region
        $region21: #{tpu_custom_call.1} parent=11 // pred_check
          %p310 = pneg %p137
        $region22: #{tpu_custom_call.1} parent=11 // pred_check_branch
          %312 = sbr.rel (%p310) target = $region24
        $region23: #{tpu_custom_call.1} parent=11 // pred_region
          _
        $region24: #{tpu_custom_call.1} parent=11 // pred_fallthru
          _
        // Predicated region
        $region25: #{tpu_custom_call.1} parent=11 // pred_check
          %p313 = pneg %p158
        $region26: #{tpu_custom_call.1} parent=11 // pred_check_branch
          %315 = sbr.rel (%p313) target = $region28
        $region27: #{tpu_custom_call.1} parent=11 // pred_region
          _
        $region28: #{tpu_custom_call.1} parent=11 // pred_fallthru
          _
        // Predicated region
        $region29: #{tpu_custom_call.1} parent=11 // pred_check
          %p316 = pneg %p179
        $region30: #{tpu_custom_call.1} parent=11 // pred_check_branch
          %318 = sbr.rel (%p316) target = $region32
        $region31: #{tpu_custom_call.1} parent=11 // pred_region
          _
        $region32: #{tpu_custom_call.1} parent=11 // pred_fallthru
          _
        // Predicated region
        $region33: #{tpu_custom_call.1} parent=11 // pred_check
          %p319 = pneg %p200
        $region34: #{tpu_custom_call.1} parent=11 // pred_check_branch
          %321 = sbr.rel (%p319) target = $region36
        $region35: #{tpu_custom_call.1} parent=11 // pred_region
          _
        $region36: #{tpu_custom_call.1} parent=11 // pred_fallthru
          _
        // Predicated region
        $region37: #{tpu_custom_call.1} parent=11 // pred_check
          %p322 = pneg %p221
        $region38: #{tpu_custom_call.1} parent=11 // pred_check_branch
          %324 = sbr.rel (%p322) target = $region40
        $region39: #{tpu_custom_call.1} parent=11 // pred_region
          _
        $region40: #{tpu_custom_call.1} parent=11 // pred_fallthru
          _
        // Predicated region
        $region41: #{tpu_custom_call.1} parent=11 // pred_check
          %p325 = pneg %p242
        $region42: #{tpu_custom_call.1} parent=11 // pred_check_branch
          %327 = sbr.rel (%p325) target = $region44
        $region43: #{tpu_custom_call.1} parent=11 // pred_region
          _
        $region44: #{tpu_custom_call.1} parent=11 // pred_fallthru
          _
        // Predicated region
        $region45: #{tpu_custom_call.1} parent=11 // pred_check
          %p328 = pneg %p263
        $region46: #{tpu_custom_call.1} parent=11 // pred_check_branch
          %330 = sbr.rel (%p328) target = $region48
        $region47: #{tpu_custom_call.1} parent=11 // pred_region
          _
        $region48: #{tpu_custom_call.1} parent=11 // pred_fallthru
          _
      $region12: #{tpu_custom_call.1} parent=5 // pred_fallthru
        _
      %p331 = scmp.lt.s32.totalorder %s22, 2
      // Predicated region
      $region49: #{tpu_custom_call.1} parent=5 // pred_check
        %p332 = pneg %p331
      $region50: #{tpu_custom_call.1} parent=5 // pred_check_branch
        %334 = sbr.rel (%p332) target = $region52
      $region51: #{tpu_custom_call.1} parent=5 // pred_region
        // Predicated region
        $region53: #{tpu_custom_call.1} parent=51 // pred_check
          %p335 = pneg %p42
        $region54: #{tpu_custom_call.1} parent=51 // pred_check_branch
          %337 = sbr.rel (%p335) target = $region56
        $region55: #{tpu_custom_call.1} parent=51 // pred_region
          %s338 = smul.u32 16, %s22
          %p339 = scmp.lt.s32.totalorder %s338, 31
          %s340 = scalar_select %p339, %s338, 31
          %s341 = smul.addr %s340, 4
          %s342 = scalar_lea.vmem %s0, %s341
          %s343 = smul.u32 16, %s22
        $region56: #{tpu_custom_call.1} parent=51 // pred_fallthru
          _
        // Predicated region
        $region57: #{tpu_custom_call.1} parent=51 // pred_check
          %p344 = pneg %p68
        $region58: #{tpu_custom_call.1} parent=51 // pred_check_branch
          %346 = sbr.rel (%p344) target = $region60
        $region59: #{tpu_custom_call.1} parent=51 // pred_region
          %s347 = smul.u32 16, %s22
          %p348 = scmp.lt.s32.totalorder %s347, 31
          %s349 = scalar_select %p348, %s347, 31
          %s350 = smul.addr %s349, 4
          %s351 = scalar_lea.vmem %s1, %s350
          %s352 = smul.u32 16, %s22
        $region60: #{tpu_custom_call.1} parent=51 // pred_fallthru
          _
      $region52: #{tpu_custom_call.1} parent=5 // pred_fallthru
        _
      %p353 = scmp.le.s32.totalorder 1, %s22
      %p354 = scmp.lt.s32.totalorder %s22, 3
      %p355 = pnand %p353, %p354
      %p356 = pneg %p355
      // Predicated region
      $region61: #{tpu_custom_call.1} parent=5 // pred_check
        _
      $region62: #{tpu_custom_call.1} parent=5 // pred_check_branch
        %358 = sbr.rel (%p355) target = $region64
      $region63: #{tpu_custom_call.1} parent=5 // pred_region
        %s359 = ssub.s32 %s22, 1
        %s360 = smul.u32 16, %s27
        %p361 = scmp.lt.s32.totalorder %s360, 31
        %s362 = scalar_select %p361, %s360, 31
        %s363 = smul.addr %s362, 4
        %s364 = scalar_lea.vmem %s0, %s363
        %p365 = pneg %p48
        %p366 = pneg %p45
        %s367 = smul.u32 16, %s27
        %p368 = scmp.lt.s32.totalorder %s367, 31
        %s369 = scalar_select %p368, %s367, 31
        %s370 = smul.addr %s369, 4
        %s371 = scalar_lea.vmem %s1, %s370
        %p372 = pneg %p74
        %p373 = pneg %p71
        %p374 = pneg %p95
        %p375 = pneg %p92
        %p376 = pneg %p116
        %p377 = pneg %p113
        %p378 = pneg %p137
        %p379 = pneg %p134
        %p380 = pneg %p158
        %p381 = pneg %p155
        %p382 = pneg %p179
        %p383 = pneg %p176
        %p384 = pneg %p200
        %p385 = pneg %p197
        %p386 = pneg %p221
        %p387 = pneg %p218
        %p388 = pneg %p242
        %p389 = pneg %p239
        %p390 = pneg %p263
        %p391 = pneg %p260
        %p392 = pneg %p289
        %p393 = pneg %p286
        %s394 = sand.u32 %s276, 1
        %s395 = scalar_lea.sflag [#allocation4], %s394
        %s396 = sand.u32 %s276, 1
        %s397 = scalar_lea.vmem [#allocation3], %s396
        %s398 = smul.u32 16, %s27
        %p399 = scmp.lt.s32.totalorder %s398, 31
        %s400 = scalar_select %p399, %s398, 31
        %s401 = smul.addr %s400, 4
        %s402 = scalar_lea.vmem %s0, %s401
        %s403 = smul.u32 16, %s27
        %s404 = smul.u32 16, %s27
        %p405 = scmp.lt.s32.totalorder %s404, 31
        %s406 = scalar_select %p405, %s404, 31
        %s407 = smul.addr %s406, 4
        %s408 = scalar_lea.vmem %s1, %s407
        %s409 = smul.u32 16, %s27
        %v411 = vld [vmem:[%s402] sm:$0xf]
        %v412 = vld [vmem:[%s402 + $0x4] sm:$0xf]
        %v413 = vld [vmem:[%s402 + $0x8] sm:$0xf]
        %v414 = vld [vmem:[%s402 + $0xc] sm:$0xf]
        %v415 = vld [vmem:[%s402 + $0x10] sm:$0xf]
        %v416 = vld [vmem:[%s402 + $0x14] sm:$0xf]
        %v417 = vld [vmem:[%s402 + $0x18] sm:$0xf]
        %v418 = vld [vmem:[%s402 + $0x1c] sm:$0xf]
        %v419 = vld [vmem:[%s402 + $0x20] sm:$0xf]
        %v420 = vld [vmem:[%s402 + $0x24] sm:$0xf]
        %v421 = vld [vmem:[%s402 + $0x28] sm:$0xf]
        %v422 = vld [vmem:[%s402 + $0x2c] sm:$0xf]
        %v423 = vld [vmem:[%s402 + $0x30] sm:$0xf]
        %v424 = vld [vmem:[%s402 + $0x34] sm:$0xf]
        %v425 = vld [vmem:[%s402 + $0x38] sm:$0xf]
        %v426 = vld [vmem:[%s402 + $0x3c] sm:$0xf]
        %v427 = vld [vmem:[%s2] sm:$0xf]
        %v428 = vld [vmem:[%s2 + $0x4] sm:$0xf]
        %v429 = vld [vmem:[%s2 + $0x8] sm:$0xf]
        %v430 = vld [vmem:[%s2 + $0xc] sm:$0xf]
        %v431 = vld [vmem:[%s2 + $0x10] sm:$0xf]
        %v432 = vld [vmem:[%s2 + $0x14] sm:$0xf]
        %v433 = vld [vmem:[%s2 + $0x18] sm:$0xf]
        %v434 = vld [vmem:[%s2 + $0x1c] sm:$0xf]
        %v435 = vld [vmem:[%s2 + $0x20] sm:$0xf]
        %v436 = vld [vmem:[%s2 + $0x24] sm:$0xf]
        %v437 = vld [vmem:[%s2 + $0x28] sm:$0xf]
        %v438 = vld [vmem:[%s2 + $0x2c] sm:$0xf]
        %v439 = vld [vmem:[%s2 + $0x30] sm:$0xf]
        %v440 = vld [vmem:[%s2 + $0x34] sm:$0xf]
        %v441 = vld [vmem:[%s2 + $0x38] sm:$0x7]
        %v442 = vld [vmem:[%s408] sm:$0xf]
        %v443 = vld [vmem:[%s408 + $0x4] sm:$0xf]
        %v444 = vld [vmem:[%s408 + $0x8] sm:$0xf]
        %v445 = vld [vmem:[%s408 + $0xc] sm:$0xf]
        %v446 = vld [vmem:[%s408 + $0x10] sm:$0xf]
        %v447 = vld [vmem:[%s408 + $0x14] sm:$0xf]
        %v448 = vld [vmem:[%s408 + $0x18] sm:$0xf]
        %v449 = vld [vmem:[%s408 + $0x1c] sm:$0xf]
        %v450 = vld [vmem:[%s408 + $0x20] sm:$0xf]
        %v451 = vld [vmem:[%s408 + $0x24] sm:$0xf]
        %v452 = vld [vmem:[%s408 + $0x28] sm:$0xf]
        %v453 = vld [vmem:[%s408 + $0x2c] sm:$0xf]
        %v454 = vld [vmem:[%s408 + $0x30] sm:$0xf]
        %v455 = vld [vmem:[%s408 + $0x34] sm:$0xf]
        %v456 = vld [vmem:[%s408 + $0x38] sm:$0xf]
        %v457 = vld [vmem:[%s408 + $0x3c] sm:$0xf]
        %v458 = vld [vmem:[%s3] sm:$0xf]
        %v459 = vld [vmem:[%s3 + $0x4] sm:$0xf]
        %v460 = vld [vmem:[%s3 + $0x8] sm:$0xf]
        %v461 = vld [vmem:[%s3 + $0xc] sm:$0xf]
        %v462 = vld [vmem:[%s3 + $0x10] sm:$0xf]
        %v463 = vld [vmem:[%s3 + $0x14] sm:$0xf]
        %v464 = vld [vmem:[%s3 + $0x18] sm:$0xf]
        %v465 = vld [vmem:[%s3 + $0x1c] sm:$0xf]
        %v466 = vld [vmem:[%s3 + $0x20] sm:$0xf]
        %v467 = vld [vmem:[%s3 + $0x24] sm:$0xf]
        %v468 = vld [vmem:[%s3 + $0x28] sm:$0xf]
        %v469 = vld [vmem:[%s3 + $0x2c] sm:$0xf]
        %v470 = vld [vmem:[%s3 + $0x30] sm:$0xf]
        %v471 = vld [vmem:[%s3 + $0x34] sm:$0xf]
        %v472 = vld [vmem:[%s3 + $0x38] sm:$0x7]
        %v489 = vunpack.c.l.b16 %v442
        %v490 = vunpack.c.l.b16 %v443
        %v491 = vunpack.c.l.b16 %v444
        %v492 = vunpack.c.l.b16 %v445
        %v493 = vunpack.c.l.b16 %v446
        %v494 = vunpack.c.l.b16 %v447
        %v495 = vunpack.c.l.b16 %v448
        %v496 = vunpack.c.l.b16 %v449
        %v497 = vunpack.c.l.b16 %v450
        %v498 = vunpack.c.l.b16 %v451
        %v499 = vunpack.c.l.b16 %v452
        %v500 = vunpack.c.l.b16 %v453
        %v501 = vunpack.c.l.b16 %v454
        %v502 = vunpack.c.l.b16 %v455
        %v503 = vunpack.c.l.b16 %v456
        %v504 = vunpack.c.l.b16 %v457
        %v505 = vpack.c.b16 %v490, %v489
        %v506 = vpack.c.b16 %v492, %v491
        %v507 = vpack.c.b16 %v494, %v493
        %v508 = vpack.c.b16 %v496, %v495
        %v509 = vpack.c.b16 %v498, %v497
        %v510 = vpack.c.b16 %v500, %v499
        %v511 = vpack.c.b16 %v502, %v501
        %v512 = vpack.c.b16 %v504, %v503
        %v528 = vunpack.c.l.b16 %v458
        %v529 = vunpack.c.l.b16 %v459
        %v530 = vunpack.c.l.b16 %v460
        %v531 = vunpack.c.l.b16 %v461
        %v532 = vunpack.c.l.b16 %v462
        %v533 = vunpack.c.l.b16 %v463
        %v534 = vunpack.c.l.b16 %v464
        %v535 = vunpack.c.l.b16 %v465
        %v536 = vunpack.c.l.b16 %v466
        %v537 = vunpack.c.l.b16 %v467
        %v538 = vunpack.c.l.b16 %v468
        %v539 = vunpack.c.l.b16 %v469
        %v540 = vunpack.c.l.b16 %v470
        %v541 = vunpack.c.l.b16 %v471
        %v542 = vunpack.c.l.b16 %v472
        %v543 = vpack.c.b16 %v529, %v528
        %v544 = vpack.c.b16 %v531, %v530
        %v545 = vpack.c.b16 %v533, %v532
        %v546 = vpack.c.b16 %v535, %v534
        %v547 = vpack.c.b16 %v537, %v536
        %v548 = vpack.c.b16 %v539, %v538
        %v549 = vpack.c.b16 %v541, %v540
        %v550 = vpack.c.b16 %v542, %v542
        %vm558 = vcmask 957440
        %v560 = vsel %vm558, %v505, 0
        %v563 = vsel %vm558, %v506, 0
        %v566 = vsel %vm558, %v507, 0
        %v569 = vsel %vm558, %v508, 0
        %v572 = vsel %vm558, %v509, 0
        %v575 = vsel %vm558, %v510, 0
        %v578 = vsel %vm558, %v511, 0
        %v581 = vsel %vm558, %v512, 0
        %vm583 = vcmask 1041408
        %vm584 = vcmask 1042432
        %v585 = vsel %vm583, 4294967295, 65535
        %v586 = vsel %vm584, %v585, 0
        %v588 = vand.u32 %v550, %v586
        %590 = vmatprep.subr.bf16.mxu0 0
        %591 = vmatpush1.bf16.msra.mxu0 %v543
        %592 = vmatprep.subr.bf16.mxu0 0
        %593 = vmatpush1.bf16.msra.mxu0 %v544
        %594 = vmatprep.subr.bf16.mxu0 0
        %595 = vmatpush1.bf16.msra.mxu0 %v545
        %596 = vmatprep.subr.bf16.mxu0 0
        %597 = vmatpush1.bf16.msra.mxu0 %v546
        %598 = vmatprep.subr.bf16.mxu0 0
        %599 = vmatpush1.bf16.msra.mxu0 %v547
        %600 = vmatprep.subr.bf16.mxu0 0
        %601 = vmatpush1.bf16.msra.mxu0 %v548
        %602 = vmatprep.subr.bf16.mxu0 0
        %603 = vmatpush1.bf16.msra.mxu0 %v549
        %604 = vmatprep.subr.bf16.mxu0 0
        %605 = vmatpush1.bf16.msra.mxu0 %v588
        %606 = vmatprep.subr.bf16.mxu0 0
        %607 = vmatpush1.bf16.msra.mxu0 0
        %608 = vmatprep.subr.bf16.mxu0 0
        %609 = vmatpush1.bf16.msra.mxu0 0
        %610 = vmatprep.subr.bf16.mxu0 0
        %611 = vmatpush1.bf16.msra.mxu0 0
        %612 = vmatprep.subr.bf16.mxu0 0
        %613 = vmatpush1.bf16.msra.mxu0 0
        %614 = vmatprep.subr.bf16.mxu0 0
        %615 = vmatpush1.bf16.msra.mxu0 0
        %616 = vmatprep.subr.bf16.mxu0 0
        %617 = vmatpush1.bf16.msra.mxu0 0
        %618 = vmatprep.subr.bf16.mxu0 0
        %619 = vmatpush1.bf16.msra.mxu0 0
        %620 = vmatprep.subr.bf16.mxu0 0
        %621 = vmatpush1.bf16.msra.mxu0 0
        %622 = vmatprep.mubr.bf16.mxu0 0
        %623 = vmatmul.mubr.bf16.gmra.mrb[0].mxu0 %v560
        %v624 = vpop.f32.mrb[0].mxu0
        %v625 = vadd.f32 0.0, %v624
        %v626 = vpop.f32.mrb[0].mxu0
        %v627 = vpop.f32.mrb[0].mxu0
        %v628 = vadd.f32 0.0, %v627
        %v629 = vpop.f32.mrb[0].mxu0
        %630 = vmatprep.mubr.bf16.mxu0 0
        %631 = vmatmul.mubr.bf16.gmra.mrb[0].mxu0 %v563
        %v632 = vpop.f32.mrb[0].mxu0
        %v633 = vadd.f32 0.0, %v632
        %v634 = vpop.f32.mrb[0].mxu0
        %v635 = vpop.f32.mrb[0].mxu0
        %v636 = vadd.f32 0.0, %v635
        %v637 = vpop.f32.mrb[0].mxu0
        %638 = vmatprep.mubr.bf16.mxu0 0
        %639 = vmatmul.mubr.bf16.gmra.mrb[0].mxu0 %v566
        %v640 = vpop.f32.mrb[0].mxu0
        %v641 = vadd.f32 0.0, %v640
        %v642 = vpop.f32.mrb[0].mxu0
        %v643 = vpop.f32.mrb[0].mxu0
        %v644 = vadd.f32 0.0, %v643
        %v645 = vpop.f32.mrb[0].mxu0
        %646 = vmatprep.mubr.bf16.mxu0 0
        %647 = vmatmul.mubr.bf16.gmra.mrb[0].mxu0 %v569
        %v648 = vpop.f32.mrb[0].mxu0
        %v649 = vadd.f32 0.0, %v648
        %v650 = vpop.f32.mrb[0].mxu0
        %v651 = vpop.f32.mrb[0].mxu0
        %v652 = vadd.f32 0.0, %v651
        %v653 = vpop.f32.mrb[0].mxu0
        %654 = vmatprep.mubr.bf16.mxu0 0
        %655 = vmatmul.mubr.bf16.gmra.mrb[0].mxu0 %v572
        %v656 = vpop.f32.mrb[0].mxu0
        %v657 = vadd.f32 0.0, %v656
        %v658 = vpop.f32.mrb[0].mxu0
        %v659 = vpop.f32.mrb[0].mxu0
        %v660 = vadd.f32 0.0, %v659
        %v661 = vpop.f32.mrb[0].mxu0
        %662 = vmatprep.mubr.bf16.mxu0 0
        %663 = vmatmul.mubr.bf16.gmra.mrb[0].mxu0 %v575
        %v664 = vpop.f32.mrb[0].mxu0
        %v665 = vadd.f32 0.0, %v664
        %v666 = vpop.f32.mrb[0].mxu0
        %v667 = vpop.f32.mrb[0].mxu0
        %v668 = vadd.f32 0.0, %v667
        %v669 = vpop.f32.mrb[0].mxu0
        %670 = vmatprep.mubr.bf16.mxu0 0
        %671 = vmatmul.mubr.bf16.gmra.mrb[0].mxu0 %v578
        %v672 = vpop.f32.mrb[0].mxu0
        %v673 = vadd.f32 0.0, %v672
        %v674 = vpop.f32.mrb[0].mxu0
        %v675 = vpop.f32.mrb[0].mxu0
        %v676 = vadd.f32 0.0, %v675
        %v677 = vpop.f32.mrb[0].mxu0
        %678 = vmatprep.mubr.bf16.mxu0 0
        %679 = vmatmul.mubr.bf16.gmra.mrb[0].mxu0 %v581
        %v680 = vpop.f32.mrb[0].mxu0
        %v681 = vadd.f32 0.0, %v680
        %v682 = vpop.f32.mrb[0].mxu0
        %v683 = vpop.f32.mrb[0].mxu0
        %v684 = vadd.f32 0.0, %v683
        %v685 = vpop.f32.mrb[0].mxu0
        %686 = vdwg.mxu0
        %v703 = vunpack.c.l.b16 %v411
        %v704 = vunpack.c.l.b16 %v412
        %v705 = vunpack.c.l.b16 %v413
        %v706 = vunpack.c.l.b16 %v414
        %v707 = vunpack.c.l.b16 %v415
        %v708 = vunpack.c.l.b16 %v416
        %v709 = vunpack.c.l.b16 %v417
        %v710 = vunpack.c.l.b16 %v418
        %v711 = vunpack.c.l.b16 %v419
        %v712 = vunpack.c.l.b16 %v420
        %v713 = vunpack.c.l.b16 %v421
        %v714 = vunpack.c.l.b16 %v422
        %v715 = vunpack.c.l.b16 %v423
        %v716 = vunpack.c.l.b16 %v424
        %v717 = vunpack.c.l.b16 %v425
        %v718 = vunpack.c.l.b16 %v426
        %v719 = vpack.c.b16 %v704, %v703
        %v720 = vpack.c.b16 %v706, %v705
        %v721 = vpack.c.b16 %v708, %v707
        %v722 = vpack.c.b16 %v710, %v709
        %v723 = vpack.c.b16 %v712, %v711
        %v724 = vpack.c.b16 %v714, %v713
        %v725 = vpack.c.b16 %v716, %v715
        %v726 = vpack.c.b16 %v718, %v717
        %v742 = vunpack.c.l.b16 %v427
        %v743 = vunpack.c.l.b16 %v428
        %v744 = vunpack.c.l.b16 %v429
        %v745 = vunpack.c.l.b16 %v430
        %v746 = vunpack.c.l.b16 %v431
        %v747 = vunpack.c.l.b16 %v432
        %v748 = vunpack.c.l.b16 %v433
        %v749 = vunpack.c.l.b16 %v434
        %v750 = vunpack.c.l.b16 %v435
        %v751 = vunpack.c.l.b16 %v436
        %v752 = vunpack.c.l.b16 %v437
        %v753 = vunpack.c.l.b16 %v438
        %v754 = vunpack.c.l.b16 %v439
        %v755 = vunpack.c.l.b16 %v440
        %v756 = vunpack.c.l.b16 %v441
        %v757 = vpack.c.b16 %v743, %v742
        %v758 = vpack.c.b16 %v745, %v744
        %v759 = vpack.c.b16 %v747, %v746
        %v760 = vpack.c.b16 %v749, %v748
        %v761 = vpack.c.b16 %v751, %v750
        %v762 = vpack.c.b16 %v753, %v752
        %v763 = vpack.c.b16 %v755, %v754
        %v764 = vpack.c.b16 %v756, %v756
        %v773 = vsel %vm558, %v719, 0
        %v776 = vsel %vm558, %v720, 0
        %v779 = vsel %vm558, %v721, 0
        %v782 = vsel %vm558, %v722, 0
        %v785 = vsel %vm558, %v723, 0
        %v788 = vsel %vm558, %v724, 0
        %v791 = vsel %vm558, %v725, 0
        %v794 = vsel %vm558, %v726, 0
        %v797 = vand.u32 %v764, %v586
        %799 = vmatprep.subr.bf16.mxu0 0
        %800 = vmatpush1.bf16.msra.mxu0 %v757
        %801 = vmatprep.subr.bf16.mxu0 0
        %802 = vmatpush1.bf16.msra.mxu0 %v758
        %803 = vmatprep.subr.bf16.mxu0 0
        %804 = vmatpush1.bf16.msra.mxu0 %v759
        %805 = vmatprep.subr.bf16.mxu0 0
        %806 = vmatpush1.bf16.msra.mxu0 %v760
        %807 = vmatprep.subr.bf16.mxu0 0
        %808 = vmatpush1.bf16.msra.mxu0 %v761
        %809 = vmatprep.subr.bf16.mxu0 0
        %810 = vmatpush1.bf16.msra.mxu0 %v762
        %811 = vmatprep.subr.bf16.mxu0 0
        %812 = vmatpush1.bf16.msra.mxu0 %v763
        %813 = vmatprep.subr.bf16.mxu0 0
        %814 = vmatpush1.bf16.msra.mxu0 %v797
        %815 = vmatprep.subr.bf16.mxu0 0
        %816 = vmatpush1.bf16.msra.mxu0 0
        %817 = vmatprep.subr.bf16.mxu0 0
        %818 = vmatpush1.bf16.msra.mxu0 0
        %819 = vmatprep.subr.bf16.mxu0 0
        %820 = vmatpush1.bf16.msra.mxu0 0
        %821 = vmatprep.subr.bf16.mxu0 0
        %822 = vmatpush1.bf16.msra.mxu0 0
        %823 = vmatprep.subr.bf16.mxu0 0
        %824 = vmatpush1.bf16.msra.mxu0 0
        %825 = vmatprep.subr.bf16.mxu0 0
        %826 = vmatpush1.bf16.msra.mxu0 0
        %827 = vmatprep.subr.bf16.mxu0 0
        %828 = vmatpush1.bf16.msra.mxu0 0
        %829 = vmatprep.subr.bf16.mxu0 0
        %830 = vmatpush1.bf16.msra.mxu0 0
        %831 = vmatprep.mubr.bf16.mxu0 0
        %832 = vmatmul.mubr.bf16.gmra.mrb[0].mxu0 %v773
        %v833 = vpop.f32.mrb[0].mxu0
        %v834 = vadd.f32 %v625, %v833
        %v835 = vpop.f32.mrb[0].mxu0
        %v836 = vpop.f32.mrb[0].mxu0
        %v837 = vadd.f32 %v628, %v836
        %v838 = vpop.f32.mrb[0].mxu0
        %839 = vmatprep.mubr.bf16.mxu0 0
        %840 = vmatmul.mubr.bf16.gmra.mrb[0].mxu0 %v776
        %v841 = vpop.f32.mrb[0].mxu0
        %v842 = vadd.f32 %v633, %v841
        %v843 = vpop.f32.mrb[0].mxu0
        %v844 = vpop.f32.mrb[0].mxu0
        %v845 = vadd.f32 %v636, %v844
        %v846 = vpop.f32.mrb[0].mxu0
        %847 = vmatprep.mubr.bf16.mxu0 0
        %848 = vmatmul.mubr.bf16.gmra.mrb[0].mxu0 %v779
        %v849 = vpop.f32.mrb[0].mxu0
        %v850 = vadd.f32 %v641, %v849
        %v851 = vpop.f32.mrb[0].mxu0
        %v852 = vpop.f32.mrb[0].mxu0
        %v853 = vadd.f32 %v644, %v852
        %v854 = vpop.f32.mrb[0].mxu0
        %855 = vmatprep.mubr.bf16.mxu0 0
        %856 = vmatmul.mubr.bf16.gmra.mrb[0].mxu0 %v782
        %v857 = vpop.f32.mrb[0].mxu0
        %v858 = vadd.f32 %v649, %v857
        %v859 = vpop.f32.mrb[0].mxu0
        %v860 = vpop.f32.mrb[0].mxu0
        %v861 = vadd.f32 %v652, %v860
        %v862 = vpop.f32.mrb[0].mxu0
        %863 = vmatprep.mubr.bf16.mxu0 0
        %864 = vmatmul.mubr.bf16.gmra.mrb[0].mxu0 %v785
        %v865 = vpop.f32.mrb[0].mxu0
        %v866 = vadd.f32 %v657, %v865
        %v867 = vpop.f32.mrb[0].mxu0
        %v868 = vpop.f32.mrb[0].mxu0
        %v869 = vadd.f32 %v660, %v868
        %v870 = vpop.f32.mrb[0].mxu0
        %871 = vmatprep.mubr.bf16.mxu0 0
        %872 = vmatmul.mubr.bf16.gmra.mrb[0].mxu0 %v788
        %v873 = vpop.f32.mrb[0].mxu0
        %v874 = vadd.f32 %v665, %v873
        %v875 = vpop.f32.mrb[0].mxu0
        %v876 = vpop.f32.mrb[0].mxu0
        %v877 = vadd.f32 %v668, %v876
        %v878 = vpop.f32.mrb[0].mxu0
        %879 = vmatprep.mubr.bf16.mxu0 0
        %880 = vmatmul.mubr.bf16.gmra.mrb[0].mxu0 %v791
        %v881 = vpop.f32.mrb[0].mxu0
        %v882 = vadd.f32 %v673, %v881
        %v883 = vpop.f32.mrb[0].mxu0
        %v884 = vpop.f32.mrb[0].mxu0
        %v885 = vadd.f32 %v676, %v884
        %v886 = vpop.f32.mrb[0].mxu0
        %887 = vmatprep.mubr.bf16.mxu0 0
        %888 = vmatmul.mubr.bf16.gmra.mrb[0].mxu0 %v794
        %v889 = vpop.f32.mrb[0].mxu0
        %v890 = vadd.f32 %v681, %v889
        %v891 = vpop.f32.mrb[0].mxu0
        %v892 = vpop.f32.mrb[0].mxu0
        %v893 = vadd.f32 %v684, %v892
        %v894 = vpop.f32.mrb[0].mxu0
        %895 = vdwg.mxu0
        %v896 = vld [vmem:[%s4] sm:$0x1]
        %v898 = vlaneseq
        %v899 = vshrl.u32 %v898, 7
        %v900 = vsub.s32 0, %v899
        %v901 = vrot.slane %v896, %v900
        %v903 = vadd.f32 %v834, %v901
        %v904 = vadd.f32 %v837, %v901
        %v905 = vadd.f32 %v842, %v901
        %v906 = vadd.f32 %v845, %v901
        %v907 = vadd.f32 %v850, %v901
        %v908 = vadd.f32 %v853, %v901
        %v909 = vadd.f32 %v858, %v901
        %v910 = vadd.f32 %v861, %v901
        %v911 = vadd.f32 %v866, %v901
        %v912 = vadd.f32 %v869, %v901
        %v913 = vadd.f32 %v874, %v901
        %v914 = vadd.f32 %v877, %v901
        %v915 = vadd.f32 %v882, %v901
        %v916 = vadd.f32 %v885, %v901
        %v917 = vadd.f32 %v890, %v901
        %v918 = vadd.f32 %v893, %v901
        %v919 = vmax.f32 %v903, 0.0
        %v920 = vmax.f32 %v904, 0.0
        %v921 = vmax.f32 %v905, 0.0
        %v922 = vmax.f32 %v906, 0.0
        %v923 = vmax.f32 %v907, 0.0
        %v924 = vmax.f32 %v908, 0.0
        %v925 = vmax.f32 %v909, 0.0
        %v926 = vmax.f32 %v910, 0.0
        %v927 = vmax.f32 %v911, 0.0
        %v928 = vmax.f32 %v912, 0.0
        %v929 = vmax.f32 %v913, 0.0
        %v930 = vmax.f32 %v914, 0.0
        %v931 = vmax.f32 %v915, 0.0
        %v932 = vmax.f32 %v916, 0.0
        %v933 = vmax.f32 %v917, 0.0
        %v934 = vmax.f32 %v918, 0.0
        %v935 = vpack.c.bf16 %v920, %v919
        %v936 = vpack.c.bf16 %v922, %v921
        %v937 = vpack.c.bf16 %v924, %v923
        %v938 = vpack.c.bf16 %v926, %v925
        %v939 = vpack.c.bf16 %v928, %v927
        %v940 = vpack.c.bf16 %v930, %v929
        %v941 = vpack.c.bf16 %v932, %v931
        %v942 = vpack.c.bf16 %v934, %v933
        %v943 = vld [vmem:[%s5] sm:$0xf]
        %v944 = vld [vmem:[%s5 + $0x4] sm:$0xf]
        %v945 = vld [vmem:[%s5 + $0x8] sm:$0xf]
        %v946 = vld [vmem:[%s5 + $0xc] sm:$0xf]
        %v947 = vld [vmem:[%s5 + $0x10] sm:$0xf]
        %v948 = vld [vmem:[%s5 + $0x14] sm:$0xf]
        %v949 = vld [vmem:[%s5 + $0x18] sm:$0xf]
        %v950 = vld [vmem:[%s5 + $0x1c] sm:$0xf]
        %v951 = vld [vmem:[%s5 + $0x20] sm:$0xf]
        %v952 = vld [vmem:[%s5 + $0x24] sm:$0xf]
        %v953 = vld [vmem:[%s5 + $0x28] sm:$0xf]
        %v954 = vld [vmem:[%s5 + $0x2c] sm:$0xf]
        %v955 = vld [vmem:[%s5 + $0x30] sm:$0xf]
        %v956 = vld [vmem:[%s5 + $0x34] sm:$0xf]
        %v957 = vld [vmem:[%s5 + $0x38] sm:$0xf]
        %v958 = vld [vmem:[%s5 + $0x3c] sm:$0xf]
        %v959 = vld [vmem:[%s6] sm:$0x1]
        %v961 = vlaneseq
        %v962 = vshrl.u32 %v961, 7
        %v963 = vsub.s32 0, %v962
        %v964 = vrot.slane %v959, %v963
        %v982 = vunpack.c.l.b16 %v943
        %v983 = vunpack.c.l.b16 %v944
        %v984 = vunpack.c.l.b16 %v945
        %v985 = vunpack.c.l.b16 %v946
        %v986 = vunpack.c.l.b16 %v947
        %v987 = vunpack.c.l.b16 %v948
        %v988 = vunpack.c.l.b16 %v949
        %v989 = vunpack.c.l.b16 %v950
        %v990 = vunpack.c.l.b16 %v951
        %v991 = vunpack.c.l.b16 %v952
        %v992 = vunpack.c.l.b16 %v953
        %v993 = vunpack.c.l.b16 %v954
        %v994 = vunpack.c.l.b16 %v955
        %v995 = vunpack.c.l.b16 %v956
        %v996 = vunpack.c.l.b16 %v957
        %v997 = vunpack.c.l.b16 %v958
        %v998 = vpack.c.b16 %v983, %v982
        %v999 = vpack.c.b16 %v985, %v984
        %v1000 = vpack.c.b16 %v987, %v986
        %v1001 = vpack.c.b16 %v989, %v988
        %v1002 = vpack.c.b16 %v991, %v990
        %v1003 = vpack.c.b16 %v993, %v992
        %v1004 = vpack.c.b16 %v995, %v994
        %v1005 = vpack.c.b16 %v997, %v996
        %1014 = vmatprep.subr.bf16.mxu0 0
        %1015 = vmatpush1.bf16.msra.mxu0 %v998
        %1016 = vmatprep.subr.bf16.mxu0 0
        %1017 = vmatpush1.bf16.msra.mxu0 %v999
        %1018 = vmatprep.subr.bf16.mxu0 0
        %1019 = vmatpush1.bf16.msra.mxu0 %v1000
        %1020 = vmatprep.subr.bf16.mxu0 0
        %1021 = vmatpush1.bf16.msra.mxu0 %v1001
        %1022 = vmatprep.subr.bf16.mxu0 0
        %1023 = vmatpush1.bf16.msra.mxu0 %v1002
        %1024 = vmatprep.subr.bf16.mxu0 0
        %1025 = vmatpush1.bf16.msra.mxu0 %v1003
        %1026 = vmatprep.subr.bf16.mxu0 0
        %1027 = vmatpush1.bf16.msra.mxu0 %v1004
        %1028 = vmatprep.subr.bf16.mxu0 0
        %1029 = vmatpush1.bf16.msra.mxu0 %v1005
        %1030 = vmatprep.subr.bf16.mxu0 0
        %1031 = vmatpush1.bf16.msra.mxu0 0
        %1032 = vmatprep.subr.bf16.mxu0 0
        %1033 = vmatpush1.bf16.msra.mxu0 0
        %1034 = vmatprep.subr.bf16.mxu0 0
        %1035 = vmatpush1.bf16.msra.mxu0 0
        %1036 = vmatprep.subr.bf16.mxu0 0
        %1037 = vmatpush1.bf16.msra.mxu0 0
        %1038 = vmatprep.subr.bf16.mxu0 0
        %1039 = vmatpush1.bf16.msra.mxu0 0
        %1040 = vmatprep.subr.bf16.mxu0 0
        %1041 = vmatpush1.bf16.msra.mxu0 0
        %1042 = vmatprep.subr.bf16.mxu0 0
        %1043 = vmatpush1.bf16.msra.mxu0 0
        %1044 = vmatprep.subr.bf16.mxu0 0
        %1045 = vmatpush1.bf16.msra.mxu0 0
        %1046 = vmatprep.mubr.bf16.mxu0 0
        %1047 = vmatmul.mubr.bf16.gmra.mrb[0].mxu0 %v935
        %v1048 = vpop.f32.mrb[0].mxu0
        %v1049 = vadd.f32 %v964, %v1048
        %v1050 = vpop.f32.mrb[0].mxu0
        %v1051 = vpop.f32.mrb[0].mxu0
        %v1052 = vadd.f32 %v964, %v1051
        %v1053 = vpop.f32.mrb[0].mxu0
        %1054 = vmatprep.mubr.bf16.mxu0 0
        %1055 = vmatmul.mubr.bf16.gmra.mrb[0].mxu0 %v936
        %v1056 = vpop.f32.mrb[0].mxu0
        %v1057 = vadd.f32 %v964, %v1056
        %v1058 = vpop.f32.mrb[0].mxu0
        %v1059 = vpop.f32.mrb[0].mxu0
        %v1060 = vadd.f32 %v964, %v1059
        %v1061 = vpop.f32.mrb[0].mxu0
        %1062 = vmatprep.mubr.bf16.mxu0 0
        %1063 = vmatmul.mubr.bf16.gmra.mrb[0].mxu0 %v937
        %v1064 = vpop.f32.mrb[0].mxu0
        %v1065 = vadd.f32 %v964, %v1064
        %v1066 = vpop.f32.mrb[0].mxu0
        %v1067 = vpop.f32.mrb[0].mxu0
        %v1068 = vadd.f32 %v964, %v1067
        %v1069 = vpop.f32.mrb[0].mxu0
        %1070 = vmatprep.mubr.bf16.mxu0 0
        %1071 = vmatmul.mubr.bf16.gmra.mrb[0].mxu0 %v938
        %v1072 = vpop.f32.mrb[0].mxu0
        %v1073 = vadd.f32 %v964, %v1072
        %v1074 = vpop.f32.mrb[0].mxu0
        %v1075 = vpop.f32.mrb[0].mxu0
        %v1076 = vadd.f32 %v964, %v1075
        %v1077 = vpop.f32.mrb[0].mxu0
        %1078 = vmatprep.mubr.bf16.mxu0 0
        %1079 = vmatmul.mubr.bf16.gmra.mrb[0].mxu0 %v939
        %v1080 = vpop.f32.mrb[0].mxu0
        %v1081 = vadd.f32 %v964, %v1080
        %v1082 = vpop.f32.mrb[0].mxu0
        %v1083 = vpop.f32.mrb[0].mxu0
        %v1084 = vadd.f32 %v964, %v1083
        %v1085 = vpop.f32.mrb[0].mxu0
        %1086 = vmatprep.mubr.bf16.mxu0 0
        %1087 = vmatmul.mubr.bf16.gmra.mrb[0].mxu0 %v940
        %v1088 = vpop.f32.mrb[0].mxu0
        %v1089 = vadd.f32 %v964, %v1088
        %v1090 = vpop.f32.mrb[0].mxu0
        %v1091 = vpop.f32.mrb[0].mxu0
        %v1092 = vadd.f32 %v964, %v1091
        %v1093 = vpop.f32.mrb[0].mxu0
        %1094 = vmatprep.mubr.bf16.mxu0 0
        %1095 = vmatmul.mubr.bf16.gmra.mrb[0].mxu0 %v941
        %v1096 = vpop.f32.mrb[0].mxu0
        %v1097 = vadd.f32 %v964, %v1096
        %v1098 = vpop.f32.mrb[0].mxu0
        %v1099 = vpop.f32.mrb[0].mxu0
        %v1100 = vadd.f32 %v964, %v1099
        %v1101 = vpop.f32.mrb[0].mxu0
        %1102 = vmatprep.mubr.bf16.mxu0 0
        %1103 = vmatmul.mubr.bf16.gmra.mrb[0].mxu0 %v942
        %v1104 = vpop.f32.mrb[0].mxu0
        %v1105 = vadd.f32 %v964, %v1104
        %v1106 = vpop.f32.mrb[0].mxu0
        %v1107 = vpop.f32.mrb[0].mxu0
        %v1108 = vadd.f32 %v964, %v1107
        %v1109 = vpop.f32.mrb[0].mxu0
        %1110 = vdwg.mxu0
        %v1111 = vmax.f32 %v1049, 0.0
        %v1112 = vmax.f32 %v1052, 0.0
        %v1113 = vmax.f32 %v1057, 0.0
        %v1114 = vmax.f32 %v1060, 0.0
        %v1115 = vmax.f32 %v1065, 0.0
        %v1116 = vmax.f32 %v1068, 0.0
        %v1117 = vmax.f32 %v1073, 0.0
        %v1118 = vmax.f32 %v1076, 0.0
        %v1119 = vmax.f32 %v1081, 0.0
        %v1120 = vmax.f32 %v1084, 0.0
        %v1121 = vmax.f32 %v1089, 0.0
        %v1122 = vmax.f32 %v1092, 0.0
        %v1123 = vmax.f32 %v1097, 0.0
        %v1124 = vmax.f32 %v1100, 0.0
        %v1125 = vmax.f32 %v1105, 0.0
        %v1126 = vmax.f32 %v1108, 0.0
        %v1127 = vpack.c.bf16 %v1112, %v1111
        %v1128 = vpack.c.bf16 %v1114, %v1113
        %v1129 = vpack.c.bf16 %v1116, %v1115
        %v1130 = vpack.c.bf16 %v1118, %v1117
        %v1131 = vpack.c.bf16 %v1120, %v1119
        %v1132 = vpack.c.bf16 %v1122, %v1121
        %v1133 = vpack.c.bf16 %v1124, %v1123
        %v1134 = vpack.c.bf16 %v1126, %v1125
        %v1135 = vld [vmem:[%s7] sm:$0xf]
        %v1136 = vld [vmem:[%s7 + $0x4] sm:$0xf]
        %v1137 = vld [vmem:[%s7 + $0x8] sm:$0xf]
        %v1138 = vld [vmem:[%s7 + $0xc] sm:$0xf]
        %v1139 = vld [vmem:[%s7 + $0x10] sm:$0xf]
        %v1140 = vld [vmem:[%s7 + $0x14] sm:$0xf]
        %v1141 = vld [vmem:[%s7 + $0x18] sm:$0xf]
        %v1142 = vld [vmem:[%s7 + $0x1c] sm:$0xf]
        %v1143 = vld [vmem:[%s8] sm:$0x1]
        %v1145 = vlaneseq
        %v1146 = vshrl.u32 %v1145, 7
        %v1147 = vsub.s32 0, %v1146
        %v1148 = vrot.slane %v1143, %v1147
        %v1158 = vunpack.c.l.b16 %v1135
        %v1159 = vunpack.c.l.b16 %v1136
        %v1160 = vunpack.c.l.b16 %v1137
        %v1161 = vunpack.c.l.b16 %v1138
        %v1162 = vunpack.c.l.b16 %v1139
        %v1163 = vunpack.c.l.b16 %v1140
        %v1164 = vunpack.c.l.b16 %v1141
        %v1165 = vunpack.c.l.b16 %v1142
        %v1166 = vpack.c.b16 %v1159, %v1158
        %v1167 = vpack.c.b16 %v1161, %v1160
        %v1168 = vpack.c.b16 %v1163, %v1162
        %v1169 = vpack.c.b16 %v1165, %v1164
        %vm1174 = vcmask 523264
        %v1176 = vsel %vm1174, %v1127, 0
        %v1179 = vsel %vm1174, %v1128, 0
        %v1182 = vsel %vm1174, %v1129, 0
        %v1185 = vsel %vm1174, %v1130, 0
        %v1188 = vsel %vm1174, %v1131, 0
        %v1191 = vsel %vm1174, %v1132, 0
        %v1194 = vsel %vm1174, %v1133, 0
        %v1197 = vsel %vm1174, %v1134, 0
        %1199 = vmatprep.subr.bf16.mxu0 0
        %1200 = vmatpush1.bf16.msra.mxu0 %v1166
        %1201 = vmatprep.subr.bf16.mxu0 0
        %1202 = vmatpush1.bf16.msra.mxu0 %v1167
        %1203 = vmatprep.subr.bf16.mxu0 0
        %1204 = vmatpush1.bf16.msra.mxu0 %v1168
        %1205 = vmatprep.subr.bf16.mxu0 0
        %1206 = vmatpush1.bf16.msra.mxu0 %v1169
        %1207 = vmatprep.subr.bf16.mxu0 0
        %1208 = vmatpush1.bf16.msra.mxu0 0
        %1209 = vmatprep.subr.bf16.mxu0 0
        %1210 = vmatpush1.bf16.msra.mxu0 0
        %1211 = vmatprep.subr.bf16.mxu0 0
        %1212 = vmatpush1.bf16.msra.mxu0 0
        %1213 = vmatprep.subr.bf16.mxu0 0
        %1214 = vmatpush1.bf16.msra.mxu0 0
        %1215 = vmatprep.subr.bf16.mxu0 0
        %1216 = vmatpush1.bf16.msra.mxu0 0
        %1217 = vmatprep.subr.bf16.mxu0 0
        %1218 = vmatpush1.bf16.msra.mxu0 0
        %1219 = vmatprep.subr.bf16.mxu0 0
        %1220 = vmatpush1.bf16.msra.mxu0 0
        %1221 = vmatprep.subr.bf16.mxu0 0
        %1222 = vmatpush1.bf16.msra.mxu0 0
        %1223 = vmatprep.subr.bf16.mxu0 0
        %1224 = vmatpush1.bf16.msra.mxu0 0
        %1225 = vmatprep.subr.bf16.mxu0 0
        %1226 = vmatpush1.bf16.msra.mxu0 0
        %1227 = vmatprep.subr.bf16.mxu0 0
        %1228 = vmatpush1.bf16.msra.mxu0 0
        %1229 = vmatprep.subr.bf16.mxu0 0
        %1230 = vmatpush1.bf16.msra.mxu0 0
        %1231 = vmatprep.mubr.bf16.mxu0 0
        %1232 = vmatmul.mubr.bf16.gmra.mrb[0].mxu0 %v1176
        %v1233 = vpop.f32.mrb[0].mxu0
        %v1234 = vadd.f32 %v1148, %v1233
        %v1235 = vpop.f32.mrb[0].mxu0
        %v1236 = vpop.f32.mrb[0].mxu0
        %v1237 = vadd.f32 %v1148, %v1236
        %v1238 = vpop.f32.mrb[0].mxu0
        %1239 = vmatprep.mubr.bf16.mxu0 0
        %1240 = vmatmul.mubr.bf16.gmra.mrb[0].mxu0 %v1179
        %v1241 = vpop.f32.mrb[0].mxu0
        %v1242 = vadd.f32 %v1148, %v1241
        %v1243 = vpop.f32.mrb[0].mxu0
        %v1244 = vpop.f32.mrb[0].mxu0
        %v1245 = vadd.f32 %v1148, %v1244
        %v1246 = vpop.f32.mrb[0].mxu0
        %1247 = vmatprep.mubr.bf16.mxu0 0
        %1248 = vmatmul.mubr.bf16.gmra.mrb[0].mxu0 %v1182
        %v1249 = vpop.f32.mrb[0].mxu0
        %v1250 = vadd.f32 %v1148, %v1249
        %v1251 = vpop.f32.mrb[0].mxu0
        %v1252 = vpop.f32.mrb[0].mxu0
        %v1253 = vadd.f32 %v1148, %v1252
        %v1254 = vpop.f32.mrb[0].mxu0
        %1255 = vmatprep.mubr.bf16.mxu0 0
        %1256 = vmatmul.mubr.bf16.gmra.mrb[0].mxu0 %v1185
        %v1257 = vpop.f32.mrb[0].mxu0
        %v1258 = vadd.f32 %v1148, %v1257
        %v1259 = vpop.f32.mrb[0].mxu0
        %v1260 = vpop.f32.mrb[0].mxu0
        %v1261 = vadd.f32 %v1148, %v1260
        %v1262 = vpop.f32.mrb[0].mxu0
        %1263 = vmatprep.mubr.bf16.mxu0 0
        %1264 = vmatmul.mubr.bf16.gmra.mrb[0].mxu0 %v1188
        %v1265 = vpop.f32.mrb[0].mxu0
        %v1266 = vadd.f32 %v1148, %v1265
        %v1267 = vpop.f32.mrb[0].mxu0
        %v1268 = vpop.f32.mrb[0].mxu0
        %v1269 = vadd.f32 %v1148, %v1268
        %v1270 = vpop.f32.mrb[0].mxu0
        %1271 = vmatprep.mubr.bf16.mxu0 0
        %1272 = vmatmul.mubr.bf16.gmra.mrb[0].mxu0 %v1191
        %v1273 = vpop.f32.mrb[0].mxu0
        %v1274 = vadd.f32 %v1148, %v1273
        %v1275 = vpop.f32.mrb[0].mxu0
        %v1276 = vpop.f32.mrb[0].mxu0
        %v1277 = vadd.f32 %v1148, %v1276
        %v1278 = vpop.f32.mrb[0].mxu0
        %1279 = vmatprep.mubr.bf16.mxu0 0
        %1280 = vmatmul.mubr.bf16.gmra.mrb[0].mxu0 %v1194
        %v1281 = vpop.f32.mrb[0].mxu0
        %v1282 = vadd.f32 %v1148, %v1281
        %v1283 = vpop.f32.mrb[0].mxu0
        %v1284 = vpop.f32.mrb[0].mxu0
        %v1285 = vadd.f32 %v1148, %v1284
        %v1286 = vpop.f32.mrb[0].mxu0
        %1287 = vmatprep.mubr.bf16.mxu0 0
        %1288 = vmatmul.mubr.bf16.gmra.mrb[0].mxu0 %v1197
        %v1289 = vpop.f32.mrb[0].mxu0
        %v1290 = vadd.f32 %v1148, %v1289
        %v1291 = vpop.f32.mrb[0].mxu0
        %v1292 = vpop.f32.mrb[0].mxu0
        %v1293 = vadd.f32 %v1148, %v1292
        %v1294 = vpop.f32.mrb[0].mxu0
        %1295 = vdwg.mxu0
        %v1296 = vmax.f32 %v1234, 0.0
        %v1297 = vmax.f32 %v1237, 0.0
        %v1298 = vmax.f32 %v1242, 0.0
        %v1299 = vmax.f32 %v1245, 0.0
        %v1300 = vmax.f32 %v1250, 0.0
        %v1301 = vmax.f32 %v1253, 0.0
        %v1302 = vmax.f32 %v1258, 0.0
        %v1303 = vmax.f32 %v1261, 0.0
        %v1304 = vmax.f32 %v1266, 0.0
        %v1305 = vmax.f32 %v1269, 0.0
        %v1306 = vmax.f32 %v1274, 0.0
        %v1307 = vmax.f32 %v1277, 0.0
        %v1308 = vmax.f32 %v1282, 0.0
        %v1309 = vmax.f32 %v1285, 0.0
        %v1310 = vmax.f32 %v1290, 0.0
        %v1311 = vmax.f32 %v1293, 0.0
        %v1312 = vpack.c.bf16 %v1297, %v1296
        %v1313 = vpack.c.bf16 %v1299, %v1298
        %v1314 = vpack.c.bf16 %v1301, %v1300
        %v1315 = vpack.c.bf16 %v1303, %v1302
        %v1316 = vpack.c.bf16 %v1305, %v1304
        %v1317 = vpack.c.bf16 %v1307, %v1306
        %v1318 = vpack.c.bf16 %v1309, %v1308
        %v1319 = vpack.c.bf16 %v1311, %v1310
        %v1320 = vld [vmem:[%s9] sm:$0x1]
        %v1321 = vld [vmem:[#allocation2] sm:$0x1]
        %1323 = vset.pattern.permute.xlu0 0
        %1324 = vperm.xlu0 %1323, %v1321
        %v1325 = vpop.permute.xlu0 %1324
        %v1327 = vlaneseq
        %v1328 = vshrl.u32 %v1327, 7
        %v1329 = vsub.s32 0, %v1328
        %v1330 = vrot.slane %v1325, %v1329
        %vm1331 = vcmask 261120
        %v1333 = vsel %vm1331, %v1320, 0
        %v1336 = vsel %vm1331, %v1312, 0
        %v1339 = vsel %vm1331, %v1313, 0
        %v1342 = vsel %vm1331, %v1314, 0
        %v1345 = vsel %vm1331, %v1315, 0
        %v1348 = vsel %vm1331, %v1316, 0
        %v1351 = vsel %vm1331, %v1317, 0
        %v1354 = vsel %vm1331, %v1318, 0
        %v1357 = vsel %vm1331, %v1319, 0
        %1359 = vmatprep.subr.bf16.mxu0 0
        %1360 = vmatpush1.bf16.xpose.msra.mxu0 %v1336
        %1361 = vmatprep.subr.bf16.mxu0 0
        %1362 = vmatpush1.bf16.xpose.msra.mxu0 %v1339
        %1363 = vmatprep.subr.bf16.mxu0 0
        %1364 = vmatpush1.bf16.xpose.msra.mxu0 %v1342
        %1365 = vmatprep.subr.bf16.mxu0 0
        %1366 = vmatpush1.bf16.xpose.msra.mxu0 %v1345
        %1367 = vmatprep.subr.bf16.mxu0 0
        %1368 = vmatpush1.bf16.xpose.msra.mxu0 %v1348
        %1369 = vmatprep.subr.bf16.mxu0 0
        %1370 = vmatpush1.bf16.xpose.msra.mxu0 %v1351
        %1371 = vmatprep.subr.bf16.mxu0 0
        %1372 = vmatpush1.bf16.xpose.msra.mxu0 %v1354
        %1373 = vmatprep.subr.bf16.mxu0 0
        %1374 = vmatpush1.bf16.xpose.msra.mxu0 %v1357
        %1375 = vmatprep.subr.bf16.mxu0 0
        %1376 = vmatpush1.bf16.xpose.msra.mxu0 0
        %1377 = vmatprep.subr.bf16.mxu0 0
        %1378 = vmatpush1.bf16.xpose.msra.mxu0 0
        %1379 = vmatprep.subr.bf16.mxu0 0
        %1380 = vmatpush1.bf16.xpose.msra.mxu0 0
        %1381 = vmatprep.subr.bf16.mxu0 0
        %1382 = vmatpush1.bf16.xpose.msra.mxu0 0
        %1383 = vmatprep.subr.bf16.mxu0 0
        %1384 = vmatpush1.bf16.xpose.msra.mxu0 0
        %1385 = vmatprep.subr.bf16.mxu0 0
        %1386 = vmatpush1.bf16.xpose.msra.mxu0 0
        %1387 = vmatprep.subr.bf16.mxu0 0
        %1388 = vmatpush1.bf16.xpose.msra.mxu0 0
        %1389 = vmatprep.subr.bf16.mxu0 0
        %1390 = vmatpush1.bf16.xpose.msra.mxu0 0
        %1391 = vmatprep.mubr.bf16.mxu0 0
        %1392 = vmatmul.mubr.bf16.gmra.mrb[0].mxu0 %v1333
        %v1393 = vpop.f32.mrb[0].mxu0
        %v1394 = vadd.f32 %v1330, %v1393
        %v1395 = vpop.f32.mrb[0].mxu0
        %v1396 = vpop.f32.mrb[0].mxu0
        %v1397 = vpop.f32.mrb[0].mxu0
        %1398 = vdwg.mxu0
        %v1399 = vxor.u32 %v1394, 2147483648
        %v1400 = vmul.f32 %v1399, 1.442695
        %v1401 = vpow.pop %v1400
        %v1402 = vadd.f32 %v1401, 1.0
        %v1403 = vrcp.pop %v1402
        %v1404 = vmul.f32 1.0, %v1403
        %1405 = vst [vmem:[%s397] sm:$0x1] %v1404
        %s1406 = sand.u32 %s276, 1
        %s1407 = scalar_lea.sflag [#allocation4], %s1406
        %s1408 = sand.u32 %s276, 1
        %s1409 = scalar_lea.vmem [#allocation3], %s1408
        // Predicated region
        $region65: #{tpu_custom_call.1} parent=63 // pred_check
          %p1410 = pneg %p286
        $region66: #{tpu_custom_call.1} parent=63 // pred_check_branch
          %1412 = sbr.rel (%p1410) target = $region68
        $region67: #{tpu_custom_call.1} parent=63 // pred_region
          %s1414 = ssub.s32 16, 16
          %1415 = vsyncadd %s1407, %s1414
          %s1416 = smul.addr %s27, 16
          %s1417 = scalar_lea.hbm %s11, %s1416
          %s1419 = sshll.u32 %s1409, 4
          %s1420 = int_to_ptr.vmem [resolvable:$true] %s1419
          %1422 = dma.vmem_to_hbm [thread:$0]  %s1420, 16, %s1417, %s1407
        $region68: #{tpu_custom_call.1} parent=63 // pred_fallthru
          _
      $region64: #{tpu_custom_call.1} parent=5 // pred_fallthru
        _
      %p1423 = scmp.le.s32.totalorder 2, %s22
      // Predicated region
      $region69: #{tpu_custom_call.1} parent=5 // pred_check
        %p1424 = pneg %p1423
      $region70: #{tpu_custom_call.1} parent=5 // pred_check_branch
        %1426 = sbr.rel (%p1424) target = $region72
      $region71: #{tpu_custom_call.1} parent=5 // pred_region
        %s1427 = ssub.s32 %s22, 2
        // Predicated region
        $region73: #{tpu_custom_call.1} parent=71 // pred_check
          %p1428 = pneg %p292
        $region74: #{tpu_custom_call.1} parent=71 // pred_check_branch
          %1430 = sbr.rel (%p1428) target = $region76
        $region75: #{tpu_custom_call.1} parent=71 // pred_region
          %s1431 = sand.u32 %s277, 1
          %s1432 = scalar_lea.sflag [#allocation4], %s1431
          %s1433 = sand.u32 %s277, 1
          %s1434 = scalar_lea.vmem [#allocation3], %s1433
          %1435 = dma.done %s1432, 16
        $region76: #{tpu_custom_call.1} parent=71 // pred_fallthru
          _
      $region72: #{tpu_custom_call.1} parent=5 // pred_fallthru
        _
    $region6: #{tpu_custom_call.1} parent=1 // loop_footer
      %s26 = sadd.s32 1, %s22
    $region7: #{tpu_custom_call.1} parent=1 // loop_footer_branch
      %21 = sbr.rel target = $region3
    $region8: #{tpu_custom_call.1} parent=1 // loop_exit
      _
    %1436 = vsyncpa [#allocation4], 1
    %s1437 = scalar_lea.sflag [#allocation4], 1
    %1438 = vsyncpa %s1437, 1

</llo_original>
